<compile_context>
chip_gen: v7x
topology: tpu7x:2x2x1
jax: 0.10.0
libtpu: 0.0.40
codegen_flags: <defaults>
</compile_context>

<pallas_src>
import functools
import math

import jax
import jax.numpy as jnp
from jax.experimental import pallas as pl
from jax.experimental.pallas import tpu as pltpu


def residual_attention_block_kernel(
    x_ref, mask_ref,
    ln1_w_ref, ln1_b_ref,
    in_w_ref, in_b_ref,
    out_w_ref, out_b_ref,
    ln2_w_ref, ln2_b_ref,
    fc_w_ref, fc_b_ref,
    proj_w_ref, proj_b_ref,
    o_ref,
    attn_sc_ref,
    *, n_head: int, compute_dtype, gelu_dtype, approx_reciprocal: bool,
):
    B, L, D = x_ref.shape          # batch tile, (padded) seq len, d_model
    hd = D // n_head
    R = B * L                      # L % 8 == 0 -> all reshapes below are views
    eps = 1e-5                     # torch.nn.LayerNorm default

    x = x_ref[...].astype(jnp.float32).reshape(R, D)     # (R, D) f32 slab
    mask = mask_ref[...].astype(jnp.float32)              # (1 or B, L, L)

    def layer_norm(v, w_ref, b_ref):                       # f32 VPU math
        mu = jnp.mean(v, axis=-1, keepdims=True)
        var = jnp.maximum(jnp.mean(v * v, axis=-1, keepdims=True) - mu * mu, 0.0)
        return (v - mu) * jax.lax.rsqrt(var + eps) * w_ref[...] + b_ref[...]

    # ---------------- attention branch ----------------
    h = layer_norm(x, ln1_w_ref, ln1_b_ref).astype(compute_dtype)
    # Packed in-projection: weight pre-transposed to (D, 3D), q rows pre-scaled
    # by 1/sqrt(hd), columns re-packed head-major [q_h|k_h|v_h] in the wrapper.
    qkv = jnp.dot(h, in_w_ref[...], preferred_element_type=jnp.float32)
    qkv = (qkv + in_b_ref[...]).astype(compute_dtype)       # bf16 slab, cast once
    qkv = qkv.reshape(B, L, 3 * D)                           # free view

    for hh in range(n_head):
        base = hh * 3 * hd                                   # contiguous head block
        blk = qkv[:, :, base:base + 3 * hd]
        q_h = blk[:, :, 0:hd]
        k_h = blk[:, :, hd:2 * hd]
        v_h = blk[:, :, 2 * hd:3 * hd]
        # Scores / softmax / PV batched over the batch-tile axis.
        s = jnp.einsum('bld,bmd->blm', q_h, k_h,
                       preferred_element_type=jnp.float32) + mask   # (B, L, L)
        s = s - jnp.max(s, axis=-1, keepdims=True)
        p = jnp.exp(s)
        denom = jnp.sum(p, axis=-1, keepdims=True)
        if approx_reciprocal:
            p = p * pl.reciprocal(denom, approx=True)        # EUP slot
        else:
            p = p / denom                                    # exact fallback
        o_h = jnp.einsum('blm,bmd->bld', p.astype(compute_dtype), v_h,
                         preferred_element_type=jnp.float32)         # (B, L, hd)
        # Write into the preallocated scratch (bounds live ranges, no concat).
        attn_sc_ref[:, :, hh * hd:(hh + 1) * hd] = o_h.astype(compute_dtype)

    attn = attn_sc_ref[...].reshape(R, D)                    # bf16, free view
    attn = jnp.dot(attn, out_w_ref[...],
                   preferred_element_type=jnp.float32) + out_b_ref[...]

    x = x + attn                                             # residual 1 (f32)

    # ---------------- MLP branch ----------------
    h2 = layer_norm(x, ln2_w_ref, ln2_b_ref).astype(compute_dtype)
    u = jnp.dot(h2, fc_w_ref[...],
                preferred_element_type=jnp.float32) + fc_b_ref[...]
    u = u.astype(gelu_dtype)                                 # bf16 on v6e/v7x
    u = u * jax.nn.sigmoid(1.702 * u)                        # QuickGELU
    m = jnp.dot(u.astype(compute_dtype), proj_w_ref[...],
                preferred_element_type=jnp.float32) + proj_b_ref[...]

    o_ref[...] = (x + m).reshape(B, L, D).astype(o_ref.dtype)   # residual 2


def _choose_b_tile(n_batch: int, seq_len: int, target_rows: int = 512) -> int:
    """Largest divisor of n_batch with b_tile*seq_len <= target_rows, capped at
    n_batch//2 so the grid has >= 2 steps (both v7x TensorCores get work).
    Raise target_rows to ~1024-2048 on v5e/v6e (128 MiB VMEM, taller MXU M)."""
    limit = max(1, n_batch // 2)
    best = 1
    for cand in range(1, n_batch + 1):
        if n_batch % cand == 0 and cand <= limit and cand * seq_len <= target_rows:
            best = cand
    return best


def residual_attention_block(x_lnd, attn_mask, params, n_head, *,
                             compute_dtype=jnp.bfloat16,
                             gelu_in_low_precision=True,   # set False on v5e
                             approx_reciprocal=True,
                             b_tile=None, target_rows=512,
                             vmem_limit_bytes=40 * 1024 * 1024,
                             single_buffer_weights=False):
    """Forward pass of ResidualAttentionBlock.

    x_lnd:     (L, N, D) seq-first activations (PyTorch nn.MultiheadAttention layout).
    attn_mask: (L, L) shared additive mask, or (N, L, L) per-batch additive mask
               (the module repeat-interleaves it over heads in torch).
    Returns (out_lnd, attn_mask), matching the module's (x, attn_mask) tuple.
    """
    L, N, D = x_lnd.shape
    if D % n_head != 0:
        raise ValueError("d_model must be divisible by n_head")
    hd = D // n_head
    f32 = jnp.float32

    # Pad L to a multiple of 8 so in-kernel flattens are free views (CLIP 77->80).
    L_pad = ((L + 7) // 8) * 8

    if b_tile is None:
        b_tile = _choose_b_tile(N, L_pad, target_rows)
    if N % b_tile != 0:
        raise ValueError("b_tile must divide the batch size")

    x_nld = jnp.transpose(x_lnd, (1, 0, 2))   # (N, L, D) batch-first for the kernel

    if attn_mask.ndim == 2:
        mask_shared = True
        mask = attn_mask.astype(f32)[None, :, :]            # (1, L, L)
    elif attn_mask.ndim == 3:
        mask_shared = False
        mask = attn_mask.astype(f32)                          # (N, L, L)
    else:
        raise ValueError("attn_mask must be (L, L) or (N, L, L)")

    if L_pad != L:
        pad_n = L_pad - L
        x_nld = jnp.pad(x_nld, ((0, 0), (0, pad_n), (0, 0)))
        mask = jnp.pad(mask, ((0, 0), (0, pad_n), (0, 0)))    # padded query rows: 0
        blocked = jnp.full(mask.shape[:-1] + (pad_n,), -1e9, f32)
        mask = jnp.concatenate([mask, blocked], axis=-1)      # padded key cols: -1e9

    row = lambda a: a.astype(f32).reshape(1, -1)

    # Fold 1/sqrt(hd) into the q rows of the packed in-projection, re-pack its
    # output features head-major as [q_h|k_h|v_h] blocks of 3*hd, and
    # pre-transpose every weight (no on-chip transposes; bf16 resident weights).
    q_scale = jnp.concatenate(
        [jnp.full((D,), 1.0 / math.sqrt(hd), f32), jnp.ones((2 * D,), f32)])
    w_in = params["in_w"].astype(f32) * q_scale[:, None]       # (3D, D)
    b_in = params["in_b"].astype(f32) * q_scale                # (3D,)
    perm = jnp.arange(3 * D).reshape(3, n_head, hd).transpose(1, 0, 2).reshape(-1)
    in_w_t = w_in[perm].T.astype(compute_dtype)                # (D, 3D), head-major cols
    in_b_r = b_in[perm].reshape(1, 3 * D)                      # f32
    out_w_t = params["out_w"].astype(f32).T.astype(compute_dtype)    # (D, D)
    fc_w_t = params["fc_w"].astype(f32).T.astype(compute_dtype)      # (D, 4D)
    proj_w_t = params["proj_w"].astype(f32).T.astype(compute_dtype)  # (4D, D)

    args = (
        x_nld, mask,
        row(params["ln1_w"]), row(params["ln1_b"]),
        in_w_t, in_b_r,
        out_w_t, row(params["out_b"]),
        row(params["ln2_w"]), row(params["ln2_b"]),
        fc_w_t, row(params["fc_b"]),
        proj_w_t, row(params["proj_b"]),
    )

    def const_spec(shape):
        # Constant-index weight blocks, resident across grid steps.
        zeros = (0,) * len(shape)
        kwargs = {}
        if single_buffer_weights:
            # Halves resident-weight VMEM where pipeline_mode is honored.
            kwargs["pipeline_mode"] = pl.Buffered(1)
        return pl.BlockSpec(shape, lambda b, _z=zeros: _z, **kwargs)

    if mask_shared:
        mask_spec = pl.BlockSpec((1, L_pad, L_pad), lambda b: (0, 0, 0))
    else:
        mask_spec = pl.BlockSpec((b_tile, L_pad, L_pad), lambda b: (b, 0, 0))

    in_specs = [
        pl.BlockSpec((b_tile, L_pad, D), lambda b: (b, 0, 0)),   # x batch tile
        mask_spec,                                               # attn_mask
        const_spec((1, D)), const_spec((1, D)),                  # ln_1 w / b
        const_spec((D, 3 * D)), const_spec((1, 3 * D)),          # in-proj W^T / b
        const_spec((D, D)), const_spec((1, D)),                  # out-proj W^T / b
        const_spec((1, D)), const_spec((1, D)),                  # ln_2 w / b
        const_spec((D, 4 * D)), const_spec((1, 4 * D)),          # c_fc W^T / b
        const_spec((4 * D, D)), const_spec((1, D)),              # c_proj W^T / b
    ]

    gelu_dtype = compute_dtype if gelu_in_low_precision else f32
    kernel = functools.partial(residual_attention_block_kernel,
                               n_head=n_head, compute_dtype=compute_dtype,
                               gelu_dtype=gelu_dtype,
                               approx_reciprocal=approx_reciprocal)

    # Advisory cost estimate for the XLA scheduler.
    R_total = N * L_pad
    flops = int(2 * R_total * D * (12 * D) + 4 * N * L_pad * L_pad * D)
    transcendentals = int(N * n_head * L_pad * L_pad + R_total * 4 * D)
    weight_bytes = sum(int(w.size) * w.dtype.itemsize
                       for w in (in_w_t, out_w_t, fc_w_t, proj_w_t))
    bytes_accessed = int(2 * x_nld.size * x_nld.dtype.itemsize
                         + mask.size * 4 + weight_bytes)

    out_nld = pl.pallas_call(
        kernel,
        out_shape=jax.ShapeDtypeStruct((N, L_pad, D), x_lnd.dtype),
        grid=(N // b_tile,),
        in_specs=in_specs,
        out_specs=pl.BlockSpec((b_tile, L_pad, D), lambda b: (b, 0, 0)),
        scratch_shapes=[pltpu.VMEM((b_tile, L_pad, D), compute_dtype)],
        compiler_params=pltpu.CompilerParams(
            dimension_semantics=("parallel",),    # batch tiles split across cores
            vmem_limit_bytes=vmem_limit_bytes,    # <= ~40 MiB keeps v7x headroom;
        ),                                        # raise to 64-96 MiB on v5e/v6e
        cost_estimate=pl.CostEstimate(flops=flops,
                                      transcendentals=transcendentals,
                                      bytes_accessed=bytes_accessed),
    )(*args)

    out = jnp.transpose(out_nld, (1, 0, 2))       # back to (L_pad, N, D)
    if L_pad != L:
        out = out[:L]
    return out, attn_mask


# ---------------- pure-JAX reference (for verification) ----------------
def ref_forward(x_lnd, attn_mask, p, n_head):
    L, N, D = x_lnd.shape
    hd = D // n_head

    def ln(v, w, b):
        mu = v.mean(-1, keepdims=True)
        var = ((v - mu) ** 2).mean(-1, keepdims=True)
        return (v - mu) / jnp.sqrt(var + 1e-5) * w + b

    x = x_lnd
    h = ln(x, p["ln1_w"], p["ln1_b"])
    qkv = h @ p["in_w"].T + p["in_b"]
    q, k, v = jnp.split(qkv, 3, axis=-1)

    def to_heads(t):  # (L, N, D) -> (N, H, L, hd)
        return jnp.transpose(t.reshape(L, N, n_head, hd), (1, 2, 0, 3))

    qh = to_heads(q) / jnp.sqrt(hd)
    kh, vh = to_heads(k), to_heads(v)
    s = jnp.einsum("nhld,nhmd->nhlm", qh, kh) + attn_mask[:, None, :, :]
    pa = jax.nn.softmax(s, axis=-1)
    o = jnp.einsum("nhlm,nhmd->nhld", pa, vh)
    o = jnp.transpose(o, (2, 0, 1, 3)).reshape(L, N, D)
    o = o @ p["out_w"].T + p["out_b"]
    x = x + o

    h2 = ln(x, p["ln2_w"], p["ln2_b"])
    u = h2 @ p["fc_w"].T + p["fc_b"]
    u = u * jax.nn.sigmoid(1.702 * u)
    m = u @ p["proj_w"].T + p["proj_b"]
    return x + m, attn_mask


def _make_params(key, D):
    keys = jax.random.split(key, 8)
    return {
        "ln1_w": jnp.ones((D,), jnp.float32),
        "ln1_b": jnp.zeros((D,), jnp.float32),
        "in_w": 0.02 * jax.random.normal(keys[0], (3 * D, D), jnp.float32),
        "in_b": 0.02 * jax.random.normal(keys[1], (3 * D,), jnp.float32),
        "out_w": 0.02 * jax.random.normal(keys[2], (D, D), jnp.float32),
        "out_b": 0.02 * jax.random.normal(keys[3], (D,), jnp.float32),
        "ln2_w": jnp.ones((D,), jnp.float32),
        "ln2_b": jnp.zeros((D,), jnp.float32),
        "fc_w": 0.02 * jax.random.normal(keys[4], (4 * D, D), jnp.float32),
        "fc_b": 0.02 * jax.random.normal(keys[5], (4 * D,), jnp.float32),
        "proj_w": 0.02 * jax.random.normal(keys[6], (D, 4 * D), jnp.float32),
        "proj_b": 0.02 * jax.random.normal(keys[7], (D,), jnp.float32),
    }


def _causal(L):
    return jnp.where(jnp.arange(L)[:, None] >= jnp.arange(L)[None, :],
                     0.0, -1e9).astype(jnp.float32)


if __name__ == "__main__":
    key = jax.random.PRNGKey(0)
    kp, kx1, kx2 = jax.random.split(key, 3)

    # ---- Test 1: per-batch (N, L, L) mask, L multiple of 8 ----
    L, N, D, H = 8, 2, 32, 4
    params = _make_params(kp, D)
    x = jax.random.normal(kx1, (L, N, D), jnp.float32)
    attn_mask = jnp.broadcast_to(_causal(L), (N, L, L))

    out, _ = residual_attention_block(x, attn_mask, params, H)
    out = jax.block_until_ready(out)
    ref_out, _ = ref_forward(x, attn_mask, params, H)
    assert out.shape == (L, N, D)
    # bf16 matmul / QuickGELU operands + approx reciprocal -> loosened tolerance.
    assert jnp.allclose(out, ref_out, atol=2e-2, rtol=2e-2), (
        float(jnp.max(jnp.abs(out - ref_out))))

    # ---- Test 2: shared (L, L) mask + sequence padding path (L=7 -> 8) ----
    L2, N2 = 7, 4
    x2 = jax.random.normal(kx2, (L2, N2, D), jnp.float32)
    mask2 = _causal(L2)                                   # shared 2-D mask
    out2, _ = residual_attention_block(x2, mask2, params, H)
    out2 = jax.block_until_ready(out2)
    ref_out2, _ = ref_forward(x2, jnp.broadcast_to(mask2, (N2, L2, L2)), params, H)
    assert out2.shape == (L2, N2, D)
    assert jnp.allclose(out2, ref_out2, atol=2e-2, rtol=2e-2), (
        float(jnp.max(jnp.abs(out2 - ref_out2))))

    print("KERNEL_OK")
</pallas_src>

<mosaic_0001>
module attributes {stable_mosaic.version = 11 : i64} {
  func.func @residual_attention_block_kernel(%arg0: i32, %arg1: memref<1x8x32xf32, #tpu.memory_space<vmem>>, %arg2: memref<1x8x8xf32, #tpu.memory_space<vmem>>, %arg3: memref<1x32xf32, #tpu.memory_space<vmem>>, %arg4: memref<1x32xf32, #tpu.memory_space<vmem>>, %arg5: memref<32x96xbf16, #tpu.memory_space<vmem>>, %arg6: memref<1x96xf32, #tpu.memory_space<vmem>>, %arg7: memref<32x32xbf16, #tpu.memory_space<vmem>>, %arg8: memref<1x32xf32, #tpu.memory_space<vmem>>, %arg9: memref<1x32xf32, #tpu.memory_space<vmem>>, %arg10: memref<1x32xf32, #tpu.memory_space<vmem>>, %arg11: memref<32x128xbf16, #tpu.memory_space<vmem>>, %arg12: memref<1x128xf32, #tpu.memory_space<vmem>>, %arg13: memref<128x32xbf16, #tpu.memory_space<vmem>>, %arg14: memref<1x32xf32, #tpu.memory_space<vmem>>, %arg15: memref<1x8x32xf32, #tpu.memory_space<vmem>>, %arg16: memref<1x8x32xbf16, #tpu.memory_space<vmem>>) attributes {dimension_semantics = [#tpu.dimension_semantics<parallel>], iteration_bounds = array<i64: 2>, scalar_prefetch = 0 : i64, scratch_operands = 1 : i64, tpu.core_type = #tpu.core_type<tc>, window_params = [{transform_indices = @transform_0, window_bounds = array<i64: 1, 8, 32>}, {transform_indices = @transform_1, window_bounds = array<i64: 1, 8, 8>}, {pipeline_mode = #tpu.pipeline_mode<synchronous>, transform_indices = @transform_2, window_bounds = array<i64: 1, 32>}, {pipeline_mode = #tpu.pipeline_mode<synchronous>, transform_indices = @transform_3, window_bounds = array<i64: 1, 32>}, {pipeline_mode = #tpu.pipeline_mode<synchronous>, transform_indices = @transform_4, window_bounds = array<i64: 32, 96>}, {pipeline_mode = #tpu.pipeline_mode<synchronous>, transform_indices = @transform_5, window_bounds = array<i64: 1, 96>}, {pipeline_mode = #tpu.pipeline_mode<synchronous>, transform_indices = @transform_6, window_bounds = array<i64: 32, 32>}, {pipeline_mode = #tpu.pipeline_mode<synchronous>, transform_indices = @transform_7, window_bounds = array<i64: 1, 32>}, {pipeline_mode = #tpu.pipeline_mode<synchronous>, transform_indices = @transform_8, window_bounds = array<i64: 1, 32>}, {pipeline_mode = #tpu.pipeline_mode<synchronous>, transform_indices = @transform_9, window_bounds = array<i64: 1, 32>}, {pipeline_mode = #tpu.pipeline_mode<synchronous>, transform_indices = @transform_10, window_bounds = array<i64: 32, 128>}, {pipeline_mode = #tpu.pipeline_mode<synchronous>, transform_indices = @transform_11, window_bounds = array<i64: 1, 128>}, {pipeline_mode = #tpu.pipeline_mode<synchronous>, transform_indices = @transform_12, window_bounds = array<i64: 128, 32>}, {pipeline_mode = #tpu.pipeline_mode<synchronous>, transform_indices = @transform_13, window_bounds = array<i64: 1, 32>}, {transform_indices = @transform_14, window_bounds = array<i64: 1, 8, 32>}]} {
    %c0 = arith.constant 0 : index
    %c0_0 = arith.constant 0 : index
    %c0_1 = arith.constant 0 : index
    %0 = vector.load %arg1[%c0, %c0_0, %c0_1] : memref<1x8x32xf32, #tpu.memory_space<vmem>>, vector<1x8x32xf32>
    %1 = vector.shape_cast %0 : vector<1x8x32xf32> to vector<8x32xf32>
    %c0_2 = arith.constant 0 : index
    %c0_3 = arith.constant 0 : index
    %c0_4 = arith.constant 0 : index
    %2 = vector.load %arg2[%c0_2, %c0_3, %c0_4] : memref<1x8x8xf32, #tpu.memory_space<vmem>>, vector<1x8x8xf32>
    %cst = arith.constant dense<0.000000e+00> : vector<8xf32>
    %3 = vector.multi_reduction <add>, %1, %cst [1] : vector<8x32xf32> to vector<8xf32>
    %4 = vector.shape_cast %3 : vector<8xf32> to vector<8x1xf32>
    %cst_5 = arith.constant 3.200000e+01 : f32
    %5 = vector.broadcast %cst_5 : f32 to vector<8x1xf32>
    %6 = arith.divf %4, %5 : vector<8x1xf32>
    %7 = arith.mulf %1, %1 : vector<8x32xf32>
    %cst_6 = arith.constant dense<0.000000e+00> : vector<8xf32>
    %8 = vector.multi_reduction <add>, %7, %cst_6 [1] : vector<8x32xf32> to vector<8xf32>
    %9 = vector.shape_cast %8 : vector<8xf32> to vector<8x1xf32>
    %cst_7 = arith.constant 3.200000e+01 : f32
    %10 = vector.broadcast %cst_7 : f32 to vector<8x1xf32>
    %11 = arith.divf %9, %10 : vector<8x1xf32>
    %12 = arith.mulf %6, %6 : vector<8x1xf32>
    %13 = arith.subf %11, %12 : vector<8x1xf32>
    %cst_8 = arith.constant 0.000000e+00 : f32
    %14 = vector.broadcast %cst_8 : f32 to vector<8x1xf32>
    %15 = arith.maximumf %13, %14 : vector<8x1xf32>
    %16 = vector.broadcast %6 : vector<8x1xf32> to vector<8x32xf32>
    %17 = arith.subf %1, %16 : vector<8x32xf32>
    %cst_9 = arith.constant 9.99999974E-6 : f32
    %18 = vector.broadcast %cst_9 : f32 to vector<8x1xf32>
    %19 = arith.addf %15, %18 : vector<8x1xf32>
    %20 = math.rsqrt %19 : vector<8x1xf32>
    %21 = vector.broadcast %20 : vector<8x1xf32> to vector<8x32xf32>
    %22 = arith.mulf %17, %21 : vector<8x32xf32>
    %c0_10 = arith.constant 0 : index
    %c0_11 = arith.constant 0 : index
    %23 = vector.load %arg3[%c0_10, %c0_11] : memref<1x32xf32, #tpu.memory_space<vmem>>, vector<1x32xf32>
    %24 = vector.broadcast %23 : vector<1x32xf32> to vector<8x32xf32>
    %25 = arith.mulf %22, %24 : vector<8x32xf32>
    %c0_12 = arith.constant 0 : index
    %c0_13 = arith.constant 0 : index
    %26 = vector.load %arg4[%c0_12, %c0_13] : memref<1x32xf32, #tpu.memory_space<vmem>>, vector<1x32xf32>
    %27 = vector.broadcast %26 : vector<1x32xf32> to vector<8x32xf32>
    %28 = arith.addf %25, %27 : vector<8x32xf32>
    %29 = arith.truncf %28 : vector<8x32xf32> to vector<8x32xbf16>
    %c0_14 = arith.constant 0 : index
    %c0_15 = arith.constant 0 : index
    %30 = vector.load %arg5[%c0_14, %c0_15] : memref<32x96xbf16, #tpu.memory_space<vmem>>, vector<32x96xbf16>
    %cst_16 = arith.constant dense<0.000000e+00> : vector<8x96xf32>
    %31 = tpu.matmul %29, %30, %cst_16 {dimension_numbers = #tpu.dot_dimension_numbers<[1], [0], [0], [1], [0, 0, 1, 1], [], []>} : vector<8x32xbf16>, vector<32x96xbf16>, vector<8x96xf32> -> vector<8x96xf32>
    %c0_17 = arith.constant 0 : index
    %c0_18 = arith.constant 0 : index
    %32 = vector.load %arg6[%c0_17, %c0_18] : memref<1x96xf32, #tpu.memory_space<vmem>>, vector<1x96xf32>
    %33 = vector.broadcast %32 : vector<1x96xf32> to vector<8x96xf32>
    %34 = arith.addf %31, %33 : vector<8x96xf32>
    %35 = arith.truncf %34 : vector<8x96xf32> to vector<8x96xbf16>
    %36 = vector.shape_cast %35 : vector<8x96xbf16> to vector<1x8x96xbf16>
    %37 = vector.extract_strided_slice %36 {offsets = [0, 0, 0], sizes = [1, 8, 24], strides = [1, 1, 1]} : vector<1x8x96xbf16> to vector<1x8x24xbf16>
    %38 = vector.extract_strided_slice %37 {offsets = [0, 0, 0], sizes = [1, 8, 8], strides = [1, 1, 1]} : vector<1x8x24xbf16> to vector<1x8x8xbf16>
    %39 = vector.extract_strided_slice %37 {offsets = [0, 0, 8], sizes = [1, 8, 8], strides = [1, 1, 1]} : vector<1x8x24xbf16> to vector<1x8x8xbf16>
    %40 = vector.extract_strided_slice %37 {offsets = [0, 0, 16], sizes = [1, 8, 8], strides = [1, 1, 1]} : vector<1x8x24xbf16> to vector<1x8x8xbf16>
    "tpu.trace_start"() <{level = 10 : i32, message = "bld,bmd->blm"}> : () -> ()
    %cst_19 = arith.constant dense<0.000000e+00> : vector<1x8x8xf32>
    %41 = tpu.matmul %38, %39, %cst_19 {dimension_numbers = #tpu.dot_dimension_numbers<[2], [2], [1], [1], [0, 0, 0, 1, 1, 1], [0], [0]>} : vector<1x8x8xbf16>, vector<1x8x8xbf16>, vector<1x8x8xf32> -> vector<1x8x8xf32>
    "tpu.trace_stop"() : () -> ()
    %42 = arith.addf %41, %2 : vector<1x8x8xf32>
    %cst_20 = arith.constant dense<0xFF800000> : vector<1x8xf32>
    %43 = vector.multi_reduction <maximumf>, %42, %cst_20 [2] : vector<1x8x8xf32> to vector<1x8xf32>
    %44 = vector.shape_cast %43 : vector<1x8xf32> to vector<1x8x1xf32>
    %45 = vector.broadcast %44 : vector<1x8x1xf32> to vector<1x8x8xf32>
    %46 = arith.subf %42, %45 : vector<1x8x8xf32>
    %47 = math.exp %46 : vector<1x8x8xf32>
    %cst_21 = arith.constant dense<0.000000e+00> : vector<1x8xf32>
    %48 = vector.multi_reduction <add>, %47, %cst_21 [2] : vector<1x8x8xf32> to vector<1x8xf32>
    %49 = vector.shape_cast %48 : vector<1x8xf32> to vector<1x8x1xf32>
    %50 = tpu.reciprocal %49 {approx = true} : vector<1x8x1xf32> -> vector<1x8x1xf32>
    %51 = vector.broadcast %50 : vector<1x8x1xf32> to vector<1x8x8xf32>
    %52 = arith.mulf %47, %51 : vector<1x8x8xf32>
    %53 = arith.truncf %52 : vector<1x8x8xf32> to vector<1x8x8xbf16>
    "tpu.trace_start"() <{level = 10 : i32, message = "blm,bmd->bld"}> : () -> ()
    %cst_22 = arith.constant dense<0.000000e+00> : vector<1x8x8xf32>
    %54 = tpu.matmul %53, %40, %cst_22 {dimension_numbers = #tpu.dot_dimension_numbers<[2], [1], [1], [2], [0, 0, 0, 1, 1, 2], [0], [0]>} : vector<1x8x8xbf16>, vector<1x8x8xbf16>, vector<1x8x8xf32> -> vector<1x8x8xf32>
    "tpu.trace_stop"() : () -> ()
    %55 = arith.truncf %54 : vector<1x8x8xf32> to vector<1x8x8xbf16>
    %c0_23 = arith.constant 0 : index
    %c0_24 = arith.constant 0 : index
    %c0_25 = arith.constant 0 : index
    %56 = vector.load %arg16[%c0_23, %c0_24, %c0_25] : memref<1x8x32xbf16, #tpu.memory_space<vmem>>, vector<1x8x8xbf16>
    tpu.vector_store %arg16[%c0_23, %c0_24, %c0_25], %55 {strides = array<i32>} : memref<1x8x32xbf16, #tpu.memory_space<vmem>>, vector<1x8x8xbf16>,
    %57 = vector.extract_strided_slice %36 {offsets = [0, 0, 24], sizes = [1, 8, 24], strides = [1, 1, 1]} : vector<1x8x96xbf16> to vector<1x8x24xbf16>
    %58 = vector.extract_strided_slice %57 {offsets = [0, 0, 0], sizes = [1, 8, 8], strides = [1, 1, 1]} : vector<1x8x24xbf16> to vector<1x8x8xbf16>
    %59 = vector.extract_strided_slice %57 {offsets = [0, 0, 8], sizes = [1, 8, 8], strides = [1, 1, 1]} : vector<1x8x24xbf16> to vector<1x8x8xbf16>
    %60 = vector.extract_strided_slice %57 {offsets = [0, 0, 16], sizes = [1, 8, 8], strides = [1, 1, 1]} : vector<1x8x24xbf16> to vector<1x8x8xbf16>
    "tpu.trace_start"() <{level = 10 : i32, message = "bld,bmd->blm"}> : () -> ()
    %cst_26 = arith.constant dense<0.000000e+00> : vector<1x8x8xf32>
    %61 = tpu.matmul %58, %59, %cst_26 {dimension_numbers = #tpu.dot_dimension_numbers<[2], [2], [1], [1], [0, 0, 0, 1, 1, 1], [0], [0]>} : vector<1x8x8xbf16>, vector<1x8x8xbf16>, vector<1x8x8xf32> -> vector<1x8x8xf32>
    "tpu.trace_stop"() : () -> ()
    %62 = arith.addf %61, %2 : vector<1x8x8xf32>
    %cst_27 = arith.constant dense<0xFF800000> : vector<1x8xf32>
    %63 = vector.multi_reduction <maximumf>, %62, %cst_27 [2] : vector<1x8x8xf32> to vector<1x8xf32>
    %64 = vector.shape_cast %63 : vector<1x8xf32> to vector<1x8x1xf32>
    %65 = vector.broadcast %64 : vector<1x8x1xf32> to vector<1x8x8xf32>
    %66 = arith.subf %62, %65 : vector<1x8x8xf32>
    %67 = math.exp %66 : vector<1x8x8xf32>
    %cst_28 = arith.constant dense<0.000000e+00> : vector<1x8xf32>
    %68 = vector.multi_reduction <add>, %67, %cst_28 [2] : vector<1x8x8xf32> to vector<1x8xf32>
    %69 = vector.shape_cast %68 : vector<1x8xf32> to vector<1x8x1xf32>
    %70 = tpu.reciprocal %69 {approx = true} : vector<1x8x1xf32> -> vector<1x8x1xf32>
    %71 = vector.broadcast %70 : vector<1x8x1xf32> to vector<1x8x8xf32>
    %72 = arith.mulf %67, %71 : vector<1x8x8xf32>
    %73 = arith.truncf %72 : vector<1x8x8xf32> to vector<1x8x8xbf16>
    "tpu.trace_start"() <{level = 10 : i32, message = "blm,bmd->bld"}> : () -> ()
    %cst_29 = arith.constant dense<0.000000e+00> : vector<1x8x8xf32>
    %74 = tpu.matmul %73, %60, %cst_29 {dimension_numbers = #tpu.dot_dimension_numbers<[2], [1], [1], [2], [0, 0, 0, 1, 1, 2], [0], [0]>} : vector<1x8x8xbf16>, vector<1x8x8xbf16>, vector<1x8x8xf32> -> vector<1x8x8xf32>
    "tpu.trace_stop"() : () -> ()
    %75 = arith.truncf %74 : vector<1x8x8xf32> to vector<1x8x8xbf16>
    %c0_30 = arith.constant 0 : index
    %c0_31 = arith.constant 0 : index
    %c8 = arith.constant 8 : index
    %76 = vector.load %arg16[%c0_30, %c0_31, %c8] : memref<1x8x32xbf16, #tpu.memory_space<vmem>>, vector<1x8x8xbf16>
    tpu.vector_store %arg16[%c0_30, %c0_31, %c8], %75 {strides = array<i32>} : memref<1x8x32xbf16, #tpu.memory_space<vmem>>, vector<1x8x8xbf16>,
    %77 = vector.extract_strided_slice %36 {offsets = [0, 0, 48], sizes = [1, 8, 24], strides = [1, 1, 1]} : vector<1x8x96xbf16> to vector<1x8x24xbf16>
    %78 = vector.extract_strided_slice %77 {offsets = [0, 0, 0], sizes = [1, 8, 8], strides = [1, 1, 1]} : vector<1x8x24xbf16> to vector<1x8x8xbf16>
    %79 = vector.extract_strided_slice %77 {offsets = [0, 0, 8], sizes = [1, 8, 8], strides = [1, 1, 1]} : vector<1x8x24xbf16> to vector<1x8x8xbf16>
    %80 = vector.extract_strided_slice %77 {offsets = [0, 0, 16], sizes = [1, 8, 8], strides = [1, 1, 1]} : vector<1x8x24xbf16> to vector<1x8x8xbf16>
    "tpu.trace_start"() <{level = 10 : i32, message = "bld,bmd->blm"}> : () -> ()
    %cst_32 = arith.constant dense<0.000000e+00> : vector<1x8x8xf32>
    %81 = tpu.matmul %78, %79, %cst_32 {dimension_numbers = #tpu.dot_dimension_numbers<[2], [2], [1], [1], [0, 0, 0, 1, 1, 1], [0], [0]>} : vector<1x8x8xbf16>, vector<1x8x8xbf16>, vector<1x8x8xf32> -> vector<1x8x8xf32>
    "tpu.trace_stop"() : () -> ()
    %82 = arith.addf %81, %2 : vector<1x8x8xf32>
    %cst_33 = arith.constant dense<0xFF800000> : vector<1x8xf32>
    %83 = vector.multi_reduction <maximumf>, %82, %cst_33 [2] : vector<1x8x8xf32> to vector<1x8xf32>
    %84 = vector.shape_cast %83 : vector<1x8xf32> to vector<1x8x1xf32>
    %85 = vector.broadcast %84 : vector<1x8x1xf32> to vector<1x8x8xf32>
    %86 = arith.subf %82, %85 : vector<1x8x8xf32>
    %87 = math.exp %86 : vector<1x8x8xf32>
    %cst_34 = arith.constant dense<0.000000e+00> : vector<1x8xf32>
    %88 = vector.multi_reduction <add>, %87, %cst_34 [2] : vector<1x8x8xf32> to vector<1x8xf32>
    %89 = vector.shape_cast %88 : vector<1x8xf32> to vector<1x8x1xf32>
    %90 = tpu.reciprocal %89 {approx = true} : vector<1x8x1xf32> -> vector<1x8x1xf32>
    %91 = vector.broadcast %90 : vector<1x8x1xf32> to vector<1x8x8xf32>
    %92 = arith.mulf %87, %91 : vector<1x8x8xf32>
    %93 = arith.truncf %92 : vector<1x8x8xf32> to vector<1x8x8xbf16>
    "tpu.trace_start"() <{level = 10 : i32, message = "blm,bmd->bld"}> : () -> ()
    %cst_35 = arith.constant dense<0.000000e+00> : vector<1x8x8xf32>
    %94 = tpu.matmul %93, %80, %cst_35 {dimension_numbers = #tpu.dot_dimension_numbers<[2], [1], [1], [2], [0, 0, 0, 1, 1, 2], [0], [0]>} : vector<1x8x8xbf16>, vector<1x8x8xbf16>, vector<1x8x8xf32> -> vector<1x8x8xf32>
    "tpu.trace_stop"() : () -> ()
    %95 = arith.truncf %94 : vector<1x8x8xf32> to vector<1x8x8xbf16>
    %c0_36 = arith.constant 0 : index
    %c0_37 = arith.constant 0 : index
    %c16 = arith.constant 16 : index
    %96 = vector.load %arg16[%c0_36, %c0_37, %c16] : memref<1x8x32xbf16, #tpu.memory_space<vmem>>, vector<1x8x8xbf16>
    tpu.vector_store %arg16[%c0_36, %c0_37, %c16], %95 {strides = array<i32>} : memref<1x8x32xbf16, #tpu.memory_space<vmem>>, vector<1x8x8xbf16>,
    %97 = vector.extract_strided_slice %36 {offsets = [0, 0, 72], sizes = [1, 8, 24], strides = [1, 1, 1]} : vector<1x8x96xbf16> to vector<1x8x24xbf16>
    %98 = vector.extract_strided_slice %97 {offsets = [0, 0, 0], sizes = [1, 8, 8], strides = [1, 1, 1]} : vector<1x8x24xbf16> to vector<1x8x8xbf16>
    %99 = vector.extract_strided_slice %97 {offsets = [0, 0, 8], sizes = [1, 8, 8], strides = [1, 1, 1]} : vector<1x8x24xbf16> to vector<1x8x8xbf16>
    %100 = vector.extract_strided_slice %97 {offsets = [0, 0, 16], sizes = [1, 8, 8], strides = [1, 1, 1]} : vector<1x8x24xbf16> to vector<1x8x8xbf16>
    "tpu.trace_start"() <{level = 10 : i32, message = "bld,bmd->blm"}> : () -> ()
    %cst_38 = arith.constant dense<0.000000e+00> : vector<1x8x8xf32>
    %101 = tpu.matmul %98, %99, %cst_38 {dimension_numbers = #tpu.dot_dimension_numbers<[2], [2], [1], [1], [0, 0, 0, 1, 1, 1], [0], [0]>} : vector<1x8x8xbf16>, vector<1x8x8xbf16>, vector<1x8x8xf32> -> vector<1x8x8xf32>
    "tpu.trace_stop"() : () -> ()
    %102 = arith.addf %101, %2 : vector<1x8x8xf32>
    %cst_39 = arith.constant dense<0xFF800000> : vector<1x8xf32>
    %103 = vector.multi_reduction <maximumf>, %102, %cst_39 [2] : vector<1x8x8xf32> to vector<1x8xf32>
    %104 = vector.shape_cast %103 : vector<1x8xf32> to vector<1x8x1xf32>
    %105 = vector.broadcast %104 : vector<1x8x1xf32> to vector<1x8x8xf32>
    %106 = arith.subf %102, %105 : vector<1x8x8xf32>
    %107 = math.exp %106 : vector<1x8x8xf32>
    %cst_40 = arith.constant dense<0.000000e+00> : vector<1x8xf32>
    %108 = vector.multi_reduction <add>, %107, %cst_40 [2] : vector<1x8x8xf32> to vector<1x8xf32>
    %109 = vector.shape_cast %108 : vector<1x8xf32> to vector<1x8x1xf32>
    %110 = tpu.reciprocal %109 {approx = true} : vector<1x8x1xf32> -> vector<1x8x1xf32>
    %111 = vector.broadcast %110 : vector<1x8x1xf32> to vector<1x8x8xf32>
    %112 = arith.mulf %107, %111 : vector<1x8x8xf32>
    %113 = arith.truncf %112 : vector<1x8x8xf32> to vector<1x8x8xbf16>
    "tpu.trace_start"() <{level = 10 : i32, message = "blm,bmd->bld"}> : () -> ()
    %cst_41 = arith.constant dense<0.000000e+00> : vector<1x8x8xf32>
    %114 = tpu.matmul %113, %100, %cst_41 {dimension_numbers = #tpu.dot_dimension_numbers<[2], [1], [1], [2], [0, 0, 0, 1, 1, 2], [0], [0]>} : vector<1x8x8xbf16>, vector<1x8x8xbf16>, vector<1x8x8xf32> -> vector<1x8x8xf32>
    "tpu.trace_stop"() : () -> ()
    %115 = arith.truncf %114 : vector<1x8x8xf32> to vector<1x8x8xbf16>
    %c0_42 = arith.constant 0 : index
    %c0_43 = arith.constant 0 : index
    %c24 = arith.constant 24 : index
    %116 = vector.load %arg16[%c0_42, %c0_43, %c24] : memref<1x8x32xbf16, #tpu.memory_space<vmem>>, vector<1x8x8xbf16>
    tpu.vector_store %arg16[%c0_42, %c0_43, %c24], %115 {strides = array<i32>} : memref<1x8x32xbf16, #tpu.memory_space<vmem>>, vector<1x8x8xbf16>,
    %c0_44 = arith.constant 0 : index
    %c0_45 = arith.constant 0 : index
    %c0_46 = arith.constant 0 : index
    %117 = vector.load %arg16[%c0_44, %c0_45, %c0_46] : memref<1x8x32xbf16, #tpu.memory_space<vmem>>, vector<1x8x32xbf16>
    %118 = vector.shape_cast %117 : vector<1x8x32xbf16> to vector<8x32xbf16>
    %c0_47 = arith.constant 0 : index
    %c0_48 = arith.constant 0 : index
    %119 = vector.load %arg7[%c0_47, %c0_48] : memref<32x32xbf16, #tpu.memory_space<vmem>>, vector<32x32xbf16>
    %cst_49 = arith.constant dense<0.000000e+00> : vector<8x32xf32>
    %120 = tpu.matmul %118, %119, %cst_49 {dimension_numbers = #tpu.dot_dimension_numbers<[1], [0], [0], [1], [0, 0, 1, 1], [], []>} : vector<8x32xbf16>, vector<32x32xbf16>, vector<8x32xf32> -> vector<8x32xf32>
    %c0_50 = arith.constant 0 : index
    %c0_51 = arith.constant 0 : index
    %121 = vector.load %arg8[%c0_50, %c0_51] : memref<1x32xf32, #tpu.memory_space<vmem>>, vector<1x32xf32>
    %122 = vector.broadcast %121 : vector<1x32xf32> to vector<8x32xf32>
    %123 = arith.addf %120, %122 : vector<8x32xf32>
    %124 = arith.addf %1, %123 : vector<8x32xf32>
    %cst_52 = arith.constant dense<0.000000e+00> : vector<8xf32>
    %125 = vector.multi_reduction <add>, %124, %cst_52 [1] : vector<8x32xf32> to vector<8xf32>
    %126 = vector.shape_cast %125 : vector<8xf32> to vector<8x1xf32>
    %cst_53 = arith.constant 3.200000e+01 : f32
    %127 = vector.broadcast %cst_53 : f32 to vector<8x1xf32>
    %128 = arith.divf %126, %127 : vector<8x1xf32>
    %129 = arith.mulf %124, %124 : vector<8x32xf32>
    %cst_54 = arith.constant dense<0.000000e+00> : vector<8xf32>
    %130 = vector.multi_reduction <add>, %129, %cst_54 [1] : vector<8x32xf32> to vector<8xf32>
    %131 = vector.shape_cast %130 : vector<8xf32> to vector<8x1xf32>
    %cst_55 = arith.constant 3.200000e+01 : f32
    %132 = vector.broadcast %cst_55 : f32 to vector<8x1xf32>
    %133 = arith.divf %131, %132 : vector<8x1xf32>
    %134 = arith.mulf %128, %128 : vector<8x1xf32>
    %135 = arith.subf %133, %134 : vector<8x1xf32>
    %cst_56 = arith.constant 0.000000e+00 : f32
    %136 = vector.broadcast %cst_56 : f32 to vector<8x1xf32>
    %137 = arith.maximumf %135, %136 : vector<8x1xf32>
    %138 = vector.broadcast %128 : vector<8x1xf32> to vector<8x32xf32>
    %139 = arith.subf %124, %138 : vector<8x32xf32>
    %cst_57 = arith.constant 9.99999974E-6 : f32
    %140 = vector.broadcast %cst_57 : f32 to vector<8x1xf32>
    %141 = arith.addf %137, %140 : vector<8x1xf32>
    %142 = math.rsqrt %141 : vector<8x1xf32>
    %143 = vector.broadcast %142 : vector<8x1xf32> to vector<8x32xf32>
    %144 = arith.mulf %139, %143 : vector<8x32xf32>
    %c0_58 = arith.constant 0 : index
    %c0_59 = arith.constant 0 : index
    %145 = vector.load %arg9[%c0_58, %c0_59] : memref<1x32xf32, #tpu.memory_space<vmem>>, vector<1x32xf32>
    %146 = vector.broadcast %145 : vector<1x32xf32> to vector<8x32xf32>
    %147 = arith.mulf %144, %146 : vector<8x32xf32>
    %c0_60 = arith.constant 0 : index
    %c0_61 = arith.constant 0 : index
    %148 = vector.load %arg10[%c0_60, %c0_61] : memref<1x32xf32, #tpu.memory_space<vmem>>, vector<1x32xf32>
    %149 = vector.broadcast %148 : vector<1x32xf32> to vector<8x32xf32>
    %150 = arith.addf %147, %149 : vector<8x32xf32>
    %151 = arith.truncf %150 : vector<8x32xf32> to vector<8x32xbf16>
    %c0_62 = arith.constant 0 : index
    %c0_63 = arith.constant 0 : index
    %152 = vector.load %arg11[%c0_62, %c0_63] : memref<32x128xbf16, #tpu.memory_space<vmem>>, vector<32x128xbf16>
    %cst_64 = arith.constant dense<0.000000e+00> : vector<8x128xf32>
    %153 = tpu.matmul %151, %152, %cst_64 {dimension_numbers = #tpu.dot_dimension_numbers<[1], [0], [0], [1], [0, 0, 1, 1], [], []>} : vector<8x32xbf16>, vector<32x128xbf16>, vector<8x128xf32> -> vector<8x128xf32>
    %c0_65 = arith.constant 0 : index
    %c0_66 = arith.constant 0 : index
    %154 = vector.load %arg12[%c0_65, %c0_66] : memref<1x128xf32, #tpu.memory_space<vmem>>, vector<1x128xf32>
    %155 = vector.broadcast %154 : vector<1x128xf32> to vector<8x128xf32>
    %156 = arith.addf %153, %155 : vector<8x128xf32>
    %157 = arith.truncf %156 : vector<8x128xf32> to vector<8x128xbf16>
    %cst_67 = arith.constant 1.703130e+00 : bf16
    %158 = vector.broadcast %cst_67 : bf16 to vector<8x128xbf16>
    %159 = arith.mulf %158, %157 : vector<8x128xbf16>
    %160 = arith.negf %159 : vector<8x128xbf16>
    %161 = math.exp %160 : vector<8x128xbf16>
    %cst_68 = arith.constant 1.000000e+00 : bf16
    %162 = vector.broadcast %cst_68 : bf16 to vector<8x128xbf16>
    %163 = arith.addf %162, %161 : vector<8x128xbf16>
    %164 = arith.divf %162, %163 : vector<8x128xbf16>
    %165 = arith.mulf %157, %164 : vector<8x128xbf16>
    %c0_69 = arith.constant 0 : index
    %c0_70 = arith.constant 0 : index
    %166 = vector.load %arg13[%c0_69, %c0_70] : memref<128x32xbf16, #tpu.memory_space<vmem>>, vector<128x32xbf16>
    %cst_71 = arith.constant dense<0.000000e+00> : vector<8x32xf32>
    %167 = tpu.matmul %165, %166, %cst_71 {dimension_numbers = #tpu.dot_dimension_numbers<[1], [0], [0], [1], [0, 0, 1, 1], [], []>} : vector<8x128xbf16>, vector<128x32xbf16>, vector<8x32xf32> -> vector<8x32xf32>
    %c0_72 = arith.constant 0 : index
    %c0_73 = arith.constant 0 : index
    %168 = vector.load %arg14[%c0_72, %c0_73] : memref<1x32xf32, #tpu.memory_space<vmem>>, vector<1x32xf32>
    %169 = vector.broadcast %168 : vector<1x32xf32> to vector<8x32xf32>
    %170 = arith.addf %167, %169 : vector<8x32xf32>
    %171 = arith.addf %124, %170 : vector<8x32xf32>
    %172 = vector.shape_cast %171 : vector<8x32xf32> to vector<1x8x32xf32>
    %c0_74 = arith.constant 0 : index
    %c0_75 = arith.constant 0 : index
    %c0_76 = arith.constant 0 : index
    %173 = vector.load %arg15[%c0_74, %c0_75, %c0_76] : memref<1x8x32xf32, #tpu.memory_space<vmem>>, vector<1x8x32xf32>
    tpu.vector_store %arg15[%c0_74, %c0_75, %c0_76], %172 {strides = array<i32>} : memref<1x8x32xf32, #tpu.memory_space<vmem>>, vector<1x8x32xf32>,
    return
  }
  func.func @transform_0(%arg0: i32) -> (i32, i32, i32) {
    %c0_i32 = arith.constant 0 : i32
    %c0_i32_0 = arith.constant 0 : i32
    %c0_i32_1 = arith.constant 0 : i32
    return %arg0, %c0_i32, %c0_i32_0 : i32, i32, i32
  }
  func.func @transform_1(%arg0: i32) -> (i32, i32, i32) {
    %c0_i32 = arith.constant 0 : i32
    %c0_i32_0 = arith.constant 0 : i32
    %c0_i32_1 = arith.constant 0 : i32
    return %arg0, %c0_i32, %c0_i32_0 : i32, i32, i32
  }
  func.func @transform_2(%arg0: i32) -> (i32, i32) {
    %c0_i32 = arith.constant 0 : i32
    %c0_i32_0 = arith.constant 0 : i32
    %c0_i32_1 = arith.constant 0 : i32
    return %c0_i32, %c0_i32_0 : i32, i32
  }
  func.func @transform_3(%arg0: i32) -> (i32, i32) {
    %c0_i32 = arith.constant 0 : i32
    %c0_i32_0 = arith.constant 0 : i32
    %c0_i32_1 = arith.constant 0 : i32
    return %c0_i32, %c0_i32_0 : i32, i32
  }
  func.func @transform_4(%arg0: i32) -> (i32, i32) {
    %c0_i32 = arith.constant 0 : i32
    %c0_i32_0 = arith.constant 0 : i32
    %c0_i32_1 = arith.constant 0 : i32
    return %c0_i32, %c0_i32_0 : i32, i32
  }
  func.func @transform_5(%arg0: i32) -> (i32, i32) {
    %c0_i32 = arith.constant 0 : i32
    %c0_i32_0 = arith.constant 0 : i32
    %c0_i32_1 = arith.constant 0 : i32
    return %c0_i32, %c0_i32_0 : i32, i32
  }
  func.func @transform_6(%arg0: i32) -> (i32, i32) {
    %c0_i32 = arith.constant 0 : i32
    %c0_i32_0 = arith.constant 0 : i32
    %c0_i32_1 = arith.constant 0 : i32
    return %c0_i32, %c0_i32_0 : i32, i32
  }
  func.func @transform_7(%arg0: i32) -> (i32, i32) {
    %c0_i32 = arith.constant 0 : i32
    %c0_i32_0 = arith.constant 0 : i32
    %c0_i32_1 = arith.constant 0 : i32
    return %c0_i32, %c0_i32_0 : i32, i32
  }
  func.func @transform_8(%arg0: i32) -> (i32, i32) {
    %c0_i32 = arith.constant 0 : i32
    %c0_i32_0 = arith.constant 0 : i32
    %c0_i32_1 = arith.constant 0 : i32
    return %c0_i32, %c0_i32_0 : i32, i32
  }
  func.func @transform_9(%arg0: i32) -> (i32, i32) {
    %c0_i32 = arith.constant 0 : i32
    %c0_i32_0 = arith.constant 0 : i32
    %c0_i32_1 = arith.constant 0 : i32
    return %c0_i32, %c0_i32_0 : i32, i32
  }
  func.func @transform_10(%arg0: i32) -> (i32, i32) {
    %c0_i32 = arith.constant 0 : i32
    %c0_i32_0 = arith.constant 0 : i32
    %c0_i32_1 = arith.constant 0 : i32
    return %c0_i32, %c0_i32_0 : i32, i32
  }
  func.func @transform_11(%arg0: i32) -> (i32, i32) {
    %c0_i32 = arith.constant 0 : i32
    %c0_i32_0 = arith.constant 0 : i32
    %c0_i32_1 = arith.constant 0 : i32
    return %c0_i32, %c0_i32_0 : i32, i32
  }
  func.func @transform_12(%arg0: i32) -> (i32, i32) {
    %c0_i32 = arith.constant 0 : i32
    %c0_i32_0 = arith.constant 0 : i32
    %c0_i32_1 = arith.constant 0 : i32
    return %c0_i32, %c0_i32_0 : i32, i32
  }
  func.func @transform_13(%arg0: i32) -> (i32, i32) {
    %c0_i32 = arith.constant 0 : i32
    %c0_i32_0 = arith.constant 0 : i32
    %c0_i32_1 = arith.constant 0 : i32
    return %c0_i32, %c0_i32_0 : i32, i32
  }
  func.func @transform_14(%arg0: i32) -> (i32, i32, i32) {
    %c0_i32 = arith.constant 0 : i32
    %c0_i32_0 = arith.constant 0 : i32
    %c0_i32_1 = arith.constant 0 : i32
    return %arg0, %c0_i32, %c0_i32_0 : i32, i32, i32
  }
}

</mosaic_0001>

<llo_original>
// kernel: tpu_custom_call.1
$region0: #{tpu_custom_call.1}
  #allocation0 [shape = 'u32[]', space=smem, size = 0x4, offset = 0x4, fixed_abs, tag = 'smem constant byte address 0x4 - core index']
  #allocation1 [shape = 'u32[144,128]{1,0:T(1,128)}', space=vmem, size = 0x12000, scoped, tag = 'internal scratch']
  #allocation2 [shape = 'bf16[1,8,32]{2,1,0:T(8,128)(2,1)}', space=vmem, size = 0x800, scoped, tag = 'scratch operand']
  %s0 = inlined_call_operand.vmem [shape: f32[2,8,32], index: 0, kind: input, shape index: {}]
  %s1 = inlined_call_operand.vmem [shape: f32[2,8,8], index: 1, kind: input, shape index: {}]
  %s2 = inlined_call_operand.vmem [shape: f32[1,32], index: 2, kind: input, shape index: {}]
  %s3 = inlined_call_operand.vmem [shape: f32[1,32], index: 3, kind: input, shape index: {}]
  %s4 = inlined_call_operand.vmem [shape: bf16[32,96], index: 4, kind: input, shape index: {}]
  %s5 = inlined_call_operand.vmem [shape: f32[1,96], index: 5, kind: input, shape index: {}]
  %s6 = inlined_call_operand.vmem [shape: bf16[32,32], index: 6, kind: input, shape index: {}]
  %s7 = inlined_call_operand.vmem [shape: f32[1,32], index: 7, kind: input, shape index: {}]
  %s8 = inlined_call_operand.vmem [shape: f32[1,32], index: 8, kind: input, shape index: {}]
  %s9 = inlined_call_operand.vmem [shape: f32[1,32], index: 9, kind: input, shape index: {}]
  %s10 = inlined_call_operand.vmem [shape: bf16[32,128], index: 10, kind: input, shape index: {}]
  %s11 = inlined_call_operand.vmem [shape: f32[1,128], index: 11, kind: input, shape index: {}]
  %s12 = inlined_call_operand.vmem [shape: bf16[128,32], index: 12, kind: input, shape index: {}]
  %s13 = inlined_call_operand.vmem [shape: f32[1,32], index: 13, kind: input, shape index: {}]
  %s14 = inlined_call_operand.hbm [shape: f32[2,8,32], index: 14, kind: output, shape index: {}]
  %s15 = sld [smem:[#allocation0]]
  $region89: #{tpu_custom_call.1} parent=0
    _
  %s17 = ssub.s32 1, %s15
  %s18 = scalar_select 0, %s17, %s15
  $region1: #{tpu_custom_call.1} parent=0
    #allocation3 [shape = 'u8[8192]{0}', space=vmem, size = 0x2000, scoped, tag = 'output window, operand 0']
    #allocation4 [shape = 's32[2]{0}', space=sflag, size = 0x8, scoped, tag = 'scoped memory for tpu_custom_call.1']
    %19 = vsyncpa [#allocation4], 0
    %s20 = scalar_lea.sflag [#allocation4], 1
    %21 = vsyncpa %s20, 0
    loop: start=0, step=1, limit=4
    $region2: #{tpu_custom_call.1} parent=1 // loop_pre_header
      _
    $region3: #{tpu_custom_call.1} parent=1 // loop_header
      %s23 = sphi 0, %s27
      %p24 = scmp.ge.s32.totalorder %s23, 4
      %s33 = sphi 0, %s35
      %s36 = sphi 0, %s33
      %s37 = sphi 0, %s36
      %s53 = sphi 0, %s37
      %s59 = sphi 0, %s61
      %s62 = sphi 0, %s59
      %s63 = sphi 0, %s62
      %s79 = sphi 0, %s63
      %s83 = sphi 0, %s83
      %s85 = sphi 0, %s83
      %s86 = sphi 0, %s85
      %s100 = sphi 0, %s86
      %s104 = sphi 0, %s104
      %s106 = sphi 0, %s104
      %s107 = sphi 0, %s106
      %s121 = sphi 0, %s107
      %s125 = sphi 0, %s125
      %s127 = sphi 0, %s125
      %s128 = sphi 0, %s127
      %s142 = sphi 0, %s128
      %s146 = sphi 0, %s146
      %s148 = sphi 0, %s146
      %s149 = sphi 0, %s148
      %s163 = sphi 0, %s149
      %s167 = sphi 0, %s167
      %s169 = sphi 0, %s167
      %s170 = sphi 0, %s169
      %s184 = sphi 0, %s170
      %s188 = sphi 0, %s188
      %s190 = sphi 0, %s188
      %s191 = sphi 0, %s190
      %s205 = sphi 0, %s191
      %s209 = sphi 0, %s209
      %s211 = sphi 0, %s209
      %s212 = sphi 0, %s211
      %s226 = sphi 0, %s212
      %s230 = sphi 0, %s230
      %s232 = sphi 0, %s230
      %s233 = sphi 0, %s232
      %s247 = sphi 0, %s233
      %s251 = sphi 0, %s251
      %s253 = sphi 0, %s251
      %s254 = sphi 0, %s253
      %s268 = sphi 0, %s254
      %s272 = sphi 0, %s272
      %s274 = sphi 0, %s272
      %s275 = sphi 0, %s274
      %s289 = sphi 0, %s275
      %s293 = sphi 0, %s293
      %s295 = sphi 0, %s293
      %s296 = sphi 0, %s295
      %s310 = sphi 0, %s296
      %s314 = sphi 0, %s314
      %s316 = sphi 0, %s314
      %s317 = sphi 0, %s316
      %s331 = sphi 0, %s317
      %s337 = sphi 0, %s339
      %s340 = sphi 0, %s337
      %s341 = sphi 0, %s340
      %s357 = sphi 0, %s341
    $region4: #{tpu_custom_call.1} parent=1 // loop_header_branch
      %26 = sbr.rel (%p24) target = $region8
    $region5: #{tpu_custom_call.1} parent=1 // loop_body
      %s28 = ssub.s32 %s23, 1
      %s29 = ssub.s32 %s23, 2
      %s30 = sadd.s32 %s23, 1
      %s31 = ssub.s32 %s23, %s30
      %p32 = scmp.eq.s32.totalorder %s31, 0
      %s34 = sadd.s32 %s33, 1
      %s35 = scalar_select %p32, %s33, %s34
      %p38 = pneg %p32
      %p39 = scmp.eq.s32.totalorder %s23, 1
      %p40 = por %p38, %p39
      %p41 = scmp.ne.s32.totalorder %s33, %s36
      %p42 = scmp.eq.s32.totalorder %s23, 0
      %p43 = por %p41, %p42
      %p44 = scmp.ne.s32.totalorder %s33, %s36
      %p45 = scmp.eq.s32.totalorder %s28, 1
      %p46 = por %p44, %p45
      %p47 = scmp.ne.s32.totalorder %s36, %s37
      %p48 = scmp.eq.s32.totalorder %s28, 0
      %p49 = por %p47, %p48
      %p50 = scmp.ne.s32.totalorder %s36, %s37
      %p51 = scmp.eq.s32.totalorder %s29, 1
      %p52 = por %p50, %p51
      %p54 = scmp.ne.s32.totalorder %s37, %s53
      %p55 = scmp.eq.s32.totalorder %s29, 0
      %p56 = por %p54, %p55
      %s57 = ssub.s32 %s23, %s30
      %p58 = scmp.eq.s32.totalorder %s57, 0
      %s60 = sadd.s32 %s59, 1
      %s61 = scalar_select %p58, %s59, %s60
      %p64 = pneg %p58
      %p65 = scmp.eq.s32.totalorder %s23, 1
      %p66 = por %p64, %p65
      %p67 = scmp.ne.s32.totalorder %s59, %s62
      %p68 = scmp.eq.s32.totalorder %s23, 0
      %p69 = por %p67, %p68
      %p70 = scmp.ne.s32.totalorder %s59, %s62
      %p71 = scmp.eq.s32.totalorder %s28, 1
      %p72 = por %p70, %p71
      %p73 = scmp.ne.s32.totalorder %s62, %s63
      %p74 = scmp.eq.s32.totalorder %s28, 0
      %p75 = por %p73, %p74
      %p76 = scmp.ne.s32.totalorder %s62, %s63
      %p77 = scmp.eq.s32.totalorder %s29, 1
      %p78 = por %p76, %p77
      %p80 = scmp.ne.s32.totalorder %s63, %s79
      %p81 = scmp.eq.s32.totalorder %s29, 0
      %p82 = por %p80, %p81
      %s84 = sadd.s32 %s83, 1
      %p87 = scmp.eq.s32.totalorder %s23, 1
      %p88 = scmp.ne.s32.totalorder %s83, %s85
      %p89 = scmp.eq.s32.totalorder %s23, 0
      %p90 = por %p88, %p89
      %p91 = scmp.ne.s32.totalorder %s83, %s85
      %p92 = scmp.eq.s32.totalorder %s28, 1
      %p93 = por %p91, %p92
      %p94 = scmp.ne.s32.totalorder %s85, %s86
      %p95 = scmp.eq.s32.totalorder %s28, 0
      %p96 = por %p94, %p95
      %p97 = scmp.ne.s32.totalorder %s85, %s86
      %p98 = scmp.eq.s32.totalorder %s29, 1
      %p99 = por %p97, %p98
      %p101 = scmp.ne.s32.totalorder %s86, %s100
      %p102 = scmp.eq.s32.totalorder %s29, 0
      %p103 = por %p101, %p102
      %s105 = sadd.s32 %s104, 1
      %p108 = scmp.eq.s32.totalorder %s23, 1
      %p109 = scmp.ne.s32.totalorder %s104, %s106
      %p110 = scmp.eq.s32.totalorder %s23, 0
      %p111 = por %p109, %p110
      %p112 = scmp.ne.s32.totalorder %s104, %s106
      %p113 = scmp.eq.s32.totalorder %s28, 1
      %p114 = por %p112, %p113
      %p115 = scmp.ne.s32.totalorder %s106, %s107
      %p116 = scmp.eq.s32.totalorder %s28, 0
      %p117 = por %p115, %p116
      %p118 = scmp.ne.s32.totalorder %s106, %s107
      %p119 = scmp.eq.s32.totalorder %s29, 1
      %p120 = por %p118, %p119
      %p122 = scmp.ne.s32.totalorder %s107, %s121
      %p123 = scmp.eq.s32.totalorder %s29, 0
      %p124 = por %p122, %p123
      %s126 = sadd.s32 %s125, 1
      %p129 = scmp.eq.s32.totalorder %s23, 1
      %p130 = scmp.ne.s32.totalorder %s125, %s127
      %p131 = scmp.eq.s32.totalorder %s23, 0
      %p132 = por %p130, %p131
      %p133 = scmp.ne.s32.totalorder %s125, %s127
      %p134 = scmp.eq.s32.totalorder %s28, 1
      %p135 = por %p133, %p134
      %p136 = scmp.ne.s32.totalorder %s127, %s128
      %p137 = scmp.eq.s32.totalorder %s28, 0
      %p138 = por %p136, %p137
      %p139 = scmp.ne.s32.totalorder %s127, %s128
      %p140 = scmp.eq.s32.totalorder %s29, 1
      %p141 = por %p139, %p140
      %p143 = scmp.ne.s32.totalorder %s128, %s142
      %p144 = scmp.eq.s32.totalorder %s29, 0
      %p145 = por %p143, %p144
      %s147 = sadd.s32 %s146, 1
      %p150 = scmp.eq.s32.totalorder %s23, 1
      %p151 = scmp.ne.s32.totalorder %s146, %s148
      %p152 = scmp.eq.s32.totalorder %s23, 0
      %p153 = por %p151, %p152
      %p154 = scmp.ne.s32.totalorder %s146, %s148
      %p155 = scmp.eq.s32.totalorder %s28, 1
      %p156 = por %p154, %p155
      %p157 = scmp.ne.s32.totalorder %s148, %s149
      %p158 = scmp.eq.s32.totalorder %s28, 0
      %p159 = por %p157, %p158
      %p160 = scmp.ne.s32.totalorder %s148, %s149
      %p161 = scmp.eq.s32.totalorder %s29, 1
      %p162 = por %p160, %p161
      %p164 = scmp.ne.s32.totalorder %s149, %s163
      %p165 = scmp.eq.s32.totalorder %s29, 0
      %p166 = por %p164, %p165
      %s168 = sadd.s32 %s167, 1
      %p171 = scmp.eq.s32.totalorder %s23, 1
      %p172 = scmp.ne.s32.totalorder %s167, %s169
      %p173 = scmp.eq.s32.totalorder %s23, 0
      %p174 = por %p172, %p173
      %p175 = scmp.ne.s32.totalorder %s167, %s169
      %p176 = scmp.eq.s32.totalorder %s28, 1
      %p177 = por %p175, %p176
      %p178 = scmp.ne.s32.totalorder %s169, %s170
      %p179 = scmp.eq.s32.totalorder %s28, 0
      %p180 = por %p178, %p179
      %p181 = scmp.ne.s32.totalorder %s169, %s170
      %p182 = scmp.eq.s32.totalorder %s29, 1
      %p183 = por %p181, %p182
      %p185 = scmp.ne.s32.totalorder %s170, %s184
      %p186 = scmp.eq.s32.totalorder %s29, 0
      %p187 = por %p185, %p186
      %s189 = sadd.s32 %s188, 1
      %p192 = scmp.eq.s32.totalorder %s23, 1
      %p193 = scmp.ne.s32.totalorder %s188, %s190
      %p194 = scmp.eq.s32.totalorder %s23, 0
      %p195 = por %p193, %p194
      %p196 = scmp.ne.s32.totalorder %s188, %s190
      %p197 = scmp.eq.s32.totalorder %s28, 1
      %p198 = por %p196, %p197
      %p199 = scmp.ne.s32.totalorder %s190, %s191
      %p200 = scmp.eq.s32.totalorder %s28, 0
      %p201 = por %p199, %p200
      %p202 = scmp.ne.s32.totalorder %s190, %s191
      %p203 = scmp.eq.s32.totalorder %s29, 1
      %p204 = por %p202, %p203
      %p206 = scmp.ne.s32.totalorder %s191, %s205
      %p207 = scmp.eq.s32.totalorder %s29, 0
      %p208 = por %p206, %p207
      %s210 = sadd.s32 %s209, 1
      %p213 = scmp.eq.s32.totalorder %s23, 1
      %p214 = scmp.ne.s32.totalorder %s209, %s211
      %p215 = scmp.eq.s32.totalorder %s23, 0
      %p216 = por %p214, %p215
      %p217 = scmp.ne.s32.totalorder %s209, %s211
      %p218 = scmp.eq.s32.totalorder %s28, 1
      %p219 = por %p217, %p218
      %p220 = scmp.ne.s32.totalorder %s211, %s212
      %p221 = scmp.eq.s32.totalorder %s28, 0
      %p222 = por %p220, %p221
      %p223 = scmp.ne.s32.totalorder %s211, %s212
      %p224 = scmp.eq.s32.totalorder %s29, 1
      %p225 = por %p223, %p224
      %p227 = scmp.ne.s32.totalorder %s212, %s226
      %p228 = scmp.eq.s32.totalorder %s29, 0
      %p229 = por %p227, %p228
      %s231 = sadd.s32 %s230, 1
      %p234 = scmp.eq.s32.totalorder %s23, 1
      %p235 = scmp.ne.s32.totalorder %s230, %s232
      %p236 = scmp.eq.s32.totalorder %s23, 0
      %p237 = por %p235, %p236
      %p238 = scmp.ne.s32.totalorder %s230, %s232
      %p239 = scmp.eq.s32.totalorder %s28, 1
      %p240 = por %p238, %p239
      %p241 = scmp.ne.s32.totalorder %s232, %s233
      %p242 = scmp.eq.s32.totalorder %s28, 0
      %p243 = por %p241, %p242
      %p244 = scmp.ne.s32.totalorder %s232, %s233
      %p245 = scmp.eq.s32.totalorder %s29, 1
      %p246 = por %p244, %p245
      %p248 = scmp.ne.s32.totalorder %s233, %s247
      %p249 = scmp.eq.s32.totalorder %s29, 0
      %p250 = por %p248, %p249
      %s252 = sadd.s32 %s251, 1
      %p255 = scmp.eq.s32.totalorder %s23, 1
      %p256 = scmp.ne.s32.totalorder %s251, %s253
      %p257 = scmp.eq.s32.totalorder %s23, 0
      %p258 = por %p256, %p257
      %p259 = scmp.ne.s32.totalorder %s251, %s253
      %p260 = scmp.eq.s32.totalorder %s28, 1
      %p261 = por %p259, %p260
      %p262 = scmp.ne.s32.totalorder %s253, %s254
      %p263 = scmp.eq.s32.totalorder %s28, 0
      %p264 = por %p262, %p263
      %p265 = scmp.ne.s32.totalorder %s253, %s254
      %p266 = scmp.eq.s32.totalorder %s29, 1
      %p267 = por %p265, %p266
      %p269 = scmp.ne.s32.totalorder %s254, %s268
      %p270 = scmp.eq.s32.totalorder %s29, 0
      %p271 = por %p269, %p270
      %s273 = sadd.s32 %s272, 1
      %p276 = scmp.eq.s32.totalorder %s23, 1
      %p277 = scmp.ne.s32.totalorder %s272, %s274
      %p278 = scmp.eq.s32.totalorder %s23, 0
      %p279 = por %p277, %p278
      %p280 = scmp.ne.s32.totalorder %s272, %s274
      %p281 = scmp.eq.s32.totalorder %s28, 1
      %p282 = por %p280, %p281
      %p283 = scmp.ne.s32.totalorder %s274, %s275
      %p284 = scmp.eq.s32.totalorder %s28, 0
      %p285 = por %p283, %p284
      %p286 = scmp.ne.s32.totalorder %s274, %s275
      %p287 = scmp.eq.s32.totalorder %s29, 1
      %p288 = por %p286, %p287
      %p290 = scmp.ne.s32.totalorder %s275, %s289
      %p291 = scmp.eq.s32.totalorder %s29, 0
      %p292 = por %p290, %p291
      %s294 = sadd.s32 %s293, 1
      %p297 = scmp.eq.s32.totalorder %s23, 1
      %p298 = scmp.ne.s32.totalorder %s293, %s295
      %p299 = scmp.eq.s32.totalorder %s23, 0
      %p300 = por %p298, %p299
      %p301 = scmp.ne.s32.totalorder %s293, %s295
      %p302 = scmp.eq.s32.totalorder %s28, 1
      %p303 = por %p301, %p302
      %p304 = scmp.ne.s32.totalorder %s295, %s296
      %p305 = scmp.eq.s32.totalorder %s28, 0
      %p306 = por %p304, %p305
      %p307 = scmp.ne.s32.totalorder %s295, %s296
      %p308 = scmp.eq.s32.totalorder %s29, 1
      %p309 = por %p307, %p308
      %p311 = scmp.ne.s32.totalorder %s296, %s310
      %p312 = scmp.eq.s32.totalorder %s29, 0
      %p313 = por %p311, %p312
      %s315 = sadd.s32 %s314, 1
      %p318 = scmp.eq.s32.totalorder %s23, 1
      %p319 = scmp.ne.s32.totalorder %s314, %s316
      %p320 = scmp.eq.s32.totalorder %s23, 0
      %p321 = por %p319, %p320
      %p322 = scmp.ne.s32.totalorder %s314, %s316
      %p323 = scmp.eq.s32.totalorder %s28, 1
      %p324 = por %p322, %p323
      %p325 = scmp.ne.s32.totalorder %s316, %s317
      %p326 = scmp.eq.s32.totalorder %s28, 0
      %p327 = por %p325, %p326
      %p328 = scmp.ne.s32.totalorder %s316, %s317
      %p329 = scmp.eq.s32.totalorder %s29, 1
      %p330 = por %p328, %p329
      %p332 = scmp.ne.s32.totalorder %s317, %s331
      %p333 = scmp.eq.s32.totalorder %s29, 0
      %p334 = por %p332, %p333
      %s335 = ssub.s32 %s23, %s30
      %p336 = scmp.eq.s32.totalorder %s335, 0
      %s338 = sadd.s32 %s337, 1
      %s339 = scalar_select %p336, %s337, %s338
      %p342 = pneg %p336
      %p343 = scmp.eq.s32.totalorder %s23, 1
      %p344 = por %p342, %p343
      %p345 = scmp.ne.s32.totalorder %s337, %s340
      %p346 = scmp.eq.s32.totalorder %s23, 0
      %p347 = por %p345, %p346
      %p348 = scmp.ne.s32.totalorder %s337, %s340
      %p349 = scmp.eq.s32.totalorder %s28, 1
      %p350 = por %p348, %p349
      %p351 = scmp.ne.s32.totalorder %s340, %s341
      %p352 = scmp.eq.s32.totalorder %s28, 0
      %p353 = por %p351, %p352
      %p354 = scmp.ne.s32.totalorder %s340, %s341
      %p355 = scmp.eq.s32.totalorder %s29, 1
      %p356 = por %p354, %p355
      %p358 = scmp.ne.s32.totalorder %s341, %s357
      %p359 = scmp.eq.s32.totalorder %s29, 0
      %p360 = por %p358, %p359
      %p361 = scmp.le.s32.totalorder 1, %s23
      %p362 = scmp.lt.s32.totalorder %s23, 3
      %p363 = pnand %p361, %p362
      %p364 = pneg %p363
      // Predicated region
      $region9: #{tpu_custom_call.1} parent=5 // pred_check
        _
      $region10: #{tpu_custom_call.1} parent=5 // pred_check_branch
        %366 = sbr.rel (%p363) target = $region12
      $region11: #{tpu_custom_call.1} parent=5 // pred_region
        %s367 = ssub.s32 %s23, 1
        // Predicated region
        $region13: #{tpu_custom_call.1} parent=11 // pred_check
          %p368 = pneg %p96
        $region14: #{tpu_custom_call.1} parent=11 // pred_check_branch
          %370 = sbr.rel (%p368) target = $region16
        $region15: #{tpu_custom_call.1} parent=11 // pred_region
          _
        $region16: #{tpu_custom_call.1} parent=11 // pred_fallthru
          _
        // Predicated region
        $region17: #{tpu_custom_call.1} parent=11 // pred_check
          %p371 = pneg %p117
        $region18: #{tpu_custom_call.1} parent=11 // pred_check_branch
          %373 = sbr.rel (%p371) target = $region20
        $region19: #{tpu_custom_call.1} parent=11 // pred_region
          _
        $region20: #{tpu_custom_call.1} parent=11 // pred_fallthru
          _
        // Predicated region
        $region21: #{tpu_custom_call.1} parent=11 // pred_check
          %p374 = pneg %p138
        $region22: #{tpu_custom_call.1} parent=11 // pred_check_branch
          %376 = sbr.rel (%p374) target = $region24
        $region23: #{tpu_custom_call.1} parent=11 // pred_region
          _
        $region24: #{tpu_custom_call.1} parent=11 // pred_fallthru
          _
        // Predicated region
        $region25: #{tpu_custom_call.1} parent=11 // pred_check
          %p377 = pneg %p159
        $region26: #{tpu_custom_call.1} parent=11 // pred_check_branch
          %379 = sbr.rel (%p377) target = $region28
        $region27: #{tpu_custom_call.1} parent=11 // pred_region
          _
        $region28: #{tpu_custom_call.1} parent=11 // pred_fallthru
          _
        // Predicated region
        $region29: #{tpu_custom_call.1} parent=11 // pred_check
          %p380 = pneg %p180
        $region30: #{tpu_custom_call.1} parent=11 // pred_check_branch
          %382 = sbr.rel (%p380) target = $region32
        $region31: #{tpu_custom_call.1} parent=11 // pred_region
          _
        $region32: #{tpu_custom_call.1} parent=11 // pred_fallthru
          _
        // Predicated region
        $region33: #{tpu_custom_call.1} parent=11 // pred_check
          %p383 = pneg %p201
        $region34: #{tpu_custom_call.1} parent=11 // pred_check_branch
          %385 = sbr.rel (%p383) target = $region36
        $region35: #{tpu_custom_call.1} parent=11 // pred_region
          _
        $region36: #{tpu_custom_call.1} parent=11 // pred_fallthru
          _
        // Predicated region
        $region37: #{tpu_custom_call.1} parent=11 // pred_check
          %p386 = pneg %p222
        $region38: #{tpu_custom_call.1} parent=11 // pred_check_branch
          %388 = sbr.rel (%p386) target = $region40
        $region39: #{tpu_custom_call.1} parent=11 // pred_region
          _
        $region40: #{tpu_custom_call.1} parent=11 // pred_fallthru
          _
        // Predicated region
        $region41: #{tpu_custom_call.1} parent=11 // pred_check
          %p389 = pneg %p243
        $region42: #{tpu_custom_call.1} parent=11 // pred_check_branch
          %391 = sbr.rel (%p389) target = $region44
        $region43: #{tpu_custom_call.1} parent=11 // pred_region
          _
        $region44: #{tpu_custom_call.1} parent=11 // pred_fallthru
          _
        // Predicated region
        $region45: #{tpu_custom_call.1} parent=11 // pred_check
          %p392 = pneg %p264
        $region46: #{tpu_custom_call.1} parent=11 // pred_check_branch
          %394 = sbr.rel (%p392) target = $region48
        $region47: #{tpu_custom_call.1} parent=11 // pred_region
          _
        $region48: #{tpu_custom_call.1} parent=11 // pred_fallthru
          _
        // Predicated region
        $region49: #{tpu_custom_call.1} parent=11 // pred_check
          %p395 = pneg %p285
        $region50: #{tpu_custom_call.1} parent=11 // pred_check_branch
          %397 = sbr.rel (%p395) target = $region52
        $region51: #{tpu_custom_call.1} parent=11 // pred_region
          _
        $region52: #{tpu_custom_call.1} parent=11 // pred_fallthru
          _
        // Predicated region
        $region53: #{tpu_custom_call.1} parent=11 // pred_check
          %p398 = pneg %p306
        $region54: #{tpu_custom_call.1} parent=11 // pred_check_branch
          %400 = sbr.rel (%p398) target = $region56
        $region55: #{tpu_custom_call.1} parent=11 // pred_region
          _
        $region56: #{tpu_custom_call.1} parent=11 // pred_fallthru
          _
        // Predicated region
        $region57: #{tpu_custom_call.1} parent=11 // pred_check
          %p401 = pneg %p327
        $region58: #{tpu_custom_call.1} parent=11 // pred_check_branch
          %403 = sbr.rel (%p401) target = $region60
        $region59: #{tpu_custom_call.1} parent=11 // pred_region
          _
        $region60: #{tpu_custom_call.1} parent=11 // pred_fallthru
          _
      $region12: #{tpu_custom_call.1} parent=5 // pred_fallthru
        _
      %p404 = scmp.lt.s32.totalorder %s23, 2
      // Predicated region
      $region61: #{tpu_custom_call.1} parent=5 // pred_check
        %p405 = pneg %p404
      $region62: #{tpu_custom_call.1} parent=5 // pred_check_branch
        %407 = sbr.rel (%p405) target = $region64
      $region63: #{tpu_custom_call.1} parent=5 // pred_region
        // Predicated region
        $region65: #{tpu_custom_call.1} parent=63 // pred_check
          %p408 = pneg %p43
        $region66: #{tpu_custom_call.1} parent=63 // pred_check_branch
          %410 = sbr.rel (%p408) target = $region68
        $region67: #{tpu_custom_call.1} parent=63 // pred_region
          %p411 = scmp.lt.s32.totalorder %s23, 1
          %s412 = scalar_select %p411, %s23, 1
          %s413 = smul.addr %s412, 8
          %s414 = scalar_lea.vmem %s0, %s413
        $region68: #{tpu_custom_call.1} parent=63 // pred_fallthru
          _
        // Predicated region
        $region69: #{tpu_custom_call.1} parent=63 // pred_check
          %p415 = pneg %p69
        $region70: #{tpu_custom_call.1} parent=63 // pred_check_branch
          %417 = sbr.rel (%p415) target = $region72
        $region71: #{tpu_custom_call.1} parent=63 // pred_region
          %p418 = scmp.lt.s32.totalorder %s23, 1
          %s419 = scalar_select %p418, %s23, 1
          %s420 = smul.addr %s419, 8
          %s421 = scalar_lea.vmem %s1, %s420
        $region72: #{tpu_custom_call.1} parent=63 // pred_fallthru
          _
      $region64: #{tpu_custom_call.1} parent=5 // pred_fallthru
        _
      %p422 = scmp.le.s32.totalorder 1, %s23
      %p423 = scmp.lt.s32.totalorder %s23, 3
      %p424 = pnand %p422, %p423
      %p425 = pneg %p424
      // Predicated region
      $region73: #{tpu_custom_call.1} parent=5 // pred_check
        _
      $region74: #{tpu_custom_call.1} parent=5 // pred_check_branch
        %427 = sbr.rel (%p424) target = $region76
      $region75: #{tpu_custom_call.1} parent=5 // pred_region
        %s428 = ssub.s32 %s23, 1
        %p429 = scmp.lt.s32.totalorder %s28, 1
        %s430 = scalar_select %p429, %s28, 1
        %s431 = smul.addr %s430, 8
        %s432 = scalar_lea.vmem %s0, %s431
        %p433 = pneg %p49
        %p434 = pneg %p46
        %p435 = scmp.lt.s32.totalorder %s28, 1
        %s436 = scalar_select %p435, %s28, 1
        %s437 = smul.addr %s436, 8
        %s438 = scalar_lea.vmem %s1, %s437
        %p439 = pneg %p75
        %p440 = pneg %p72
        %p441 = pneg %p96
        %p442 = pneg %p93
        %p443 = pneg %p117
        %p444 = pneg %p114
        %p445 = pneg %p138
        %p446 = pneg %p135
        %p447 = pneg %p159
        %p448 = pneg %p156
        %p449 = pneg %p180
        %p450 = pneg %p177
        %p451 = pneg %p201
        %p452 = pneg %p198
        %p453 = pneg %p222
        %p454 = pneg %p219
        %p455 = pneg %p243
        %p456 = pneg %p240
        %p457 = pneg %p264
        %p458 = pneg %p261
        %p459 = pneg %p285
        %p460 = pneg %p282
        %p461 = pneg %p306
        %p462 = pneg %p303
        %p463 = pneg %p327
        %p464 = pneg %p324
        %p465 = pneg %p353
        %p466 = pneg %p350
        %s467 = sand.u32 %s340, 1
        %s468 = scalar_lea.sflag [#allocation4], %s467
        %s469 = sand.u32 %s340, 1
        %s470 = smul.addr %s469, 8
        %s471 = scalar_lea.vmem [#allocation3], %s470
        %p472 = scmp.lt.s32.totalorder %s28, 1
        %s473 = scalar_select %p472, %s28, 1
        %s474 = smul.addr %s473, 8
        %s475 = scalar_lea.vmem %s0, %s474
        %p476 = scmp.lt.s32.totalorder %s28, 1
        %s477 = scalar_select %p476, %s28, 1
        %s478 = smul.addr %s477, 8
        %s479 = scalar_lea.vmem %s1, %s478
        %v483 = vld [vmem:[%s475] sm:$0xff]
        %v484 = vld [vmem:[%s479] sm:$0xff]
        %vm485 = vcmask 261120
        %v486 = vsel %vm485, %v483, 0.0
        %487 = vadd.xlane.f32.xlu0 %v486
        %v488 = vpop.xlane.xlu0 %487
        %v489 = vrcp.pop 32.0
        %v490 = vmul.f32 %v488, %v489
        %v491 = vmul.f32 %v483, %v483
        %v492 = vsel %vm485, %v491, 0.0
        %493 = vadd.xlane.f32.xlu0 %v492
        %v494 = vpop.xlane.xlu0 %493
        %v495 = vmul.f32 %v494, %v489
        %v496 = vmul.f32 %v490, %v490
        %v497 = vsub.f32 %v495, %v496
        %v498 = vmax.f32 %v497, 0.0
        %v499 = vsub.f32 %v483, %v490
        %v500 = vadd.f32 %v498, 1e-05
        %v501 = vrsqrt.pop %v500
        %v502 = vmul.f32 %v499, %v501
        %v503 = vld [vmem:[%s2] sm:$0x1]
        %v505 = vlaneseq
        %v506 = vshrl.u32 %v505, 7
        %v507 = vsub.s32 0, %v506
        %v508 = vrot.slane %v503, %v507
        %v510 = vmul.f32 %v502, %v508
        %v511 = vld [vmem:[%s3] sm:$0x1]
        %v513 = vlaneseq
        %v514 = vshrl.u32 %v513, 7
        %v515 = vsub.s32 0, %v514
        %v516 = vrot.slane %v511, %v515
        %v518 = vadd.f32 %v510, %v516
        %v519 = vpack.c.bf16 %v518, %v518
        %v520 = vld [vmem:[%s4] sm:$0xf]
        %v521 = vld [vmem:[%s4 + $0x4] sm:$0xf]
        %v522 = vld [vmem:[%s4 + $0x8] sm:$0xf]
        %v523 = vld [vmem:[%s4 + $0xc] sm:$0xf]
        %v524 = vld [vmem:[%s5] sm:$0x1]
        %v526 = vlaneseq
        %v527 = vshrl.u32 %v526, 7
        %v528 = vsub.s32 0, %v527
        %v529 = vrot.slane %v524, %v528
        %v535 = vunpack.c.l.b16 %v520
        %v536 = vunpack.c.l.b16 %v521
        %v537 = vunpack.c.l.b16 %v522
        %v538 = vunpack.c.l.b16 %v523
        %v539 = vpack.c.b16 %v536, %v535
        %v540 = vpack.c.b16 %v538, %v537
        %v544 = vsel %vm485, %v519, 0
        %546 = vmatprep.subr.bf16.mxu0 0
        %547 = vmatpush1.bf16.msra.mxu0 %v539
        %548 = vmatprep.subr.bf16.mxu0 0
        %549 = vmatpush1.bf16.msra.mxu0 %v540
        %550 = vmatprep.subr.bf16.mxu0 0
        %551 = vmatpush1.bf16.msra.mxu0 0
        %552 = vmatprep.subr.bf16.mxu0 0
        %553 = vmatpush1.bf16.msra.mxu0 0
        %554 = vmatprep.subr.bf16.mxu0 0
        %555 = vmatpush1.bf16.msra.mxu0 0
        %556 = vmatprep.subr.bf16.mxu0 0
        %557 = vmatpush1.bf16.msra.mxu0 0
        %558 = vmatprep.subr.bf16.mxu0 0
        %559 = vmatpush1.bf16.msra.mxu0 0
        %560 = vmatprep.subr.bf16.mxu0 0
        %561 = vmatpush1.bf16.msra.mxu0 0
        %562 = vmatprep.subr.bf16.mxu0 0
        %563 = vmatpush1.bf16.msra.mxu0 0
        %564 = vmatprep.subr.bf16.mxu0 0
        %565 = vmatpush1.bf16.msra.mxu0 0
        %566 = vmatprep.subr.bf16.mxu0 0
        %567 = vmatpush1.bf16.msra.mxu0 0
        %568 = vmatprep.subr.bf16.mxu0 0
        %569 = vmatpush1.bf16.msra.mxu0 0
        %570 = vmatprep.subr.bf16.mxu0 0
        %571 = vmatpush1.bf16.msra.mxu0 0
        %572 = vmatprep.subr.bf16.mxu0 0
        %573 = vmatpush1.bf16.msra.mxu0 0
        %574 = vmatprep.subr.bf16.mxu0 0
        %575 = vmatpush1.bf16.msra.mxu0 0
        %576 = vmatprep.subr.bf16.mxu0 0
        %577 = vmatpush1.bf16.msra.mxu0 0
        %578 = vmatprep.mubr.bf16.mxu0 0
        %579 = vmatmul.mubr.bf16.gmra.mrb[0].mxu0 %v544
        %v580 = vpop.f32.mrb[0].mxu0
        %v581 = vadd.f32 %v529, %v580
        %v582 = vpop.f32.mrb[0].mxu0
        %v583 = vpop.f32.mrb[0].mxu0
        %v584 = vpop.f32.mrb[0].mxu0
        %585 = vdwg.mxu0
        %v586 = vpack.c.bf16 %v581, %v581
        %588 = vrot.lane.b32.xlu0 %v586, 120
        %v589 = vpop.permute.xlu0 %588
        %vm590 = vcmask 64512
        %v592 = vsel %vm590, %v586, 0
        %v595 = vsel %vm590, %v589, 0
        %597 = vmatprep.subr.bf16.mxu0 0
        %598 = vmatpush1.bf16.xpose.msra.mxu0 %v595
        %599 = vmatprep.subr.bf16.mxu0 0
        %600 = vmatpush1.bf16.xpose.msra.mxu0 0
        %601 = vmatprep.subr.bf16.mxu0 0
        %602 = vmatpush1.bf16.xpose.msra.mxu0 0
        %603 = vmatprep.subr.bf16.mxu0 0
        %604 = vmatpush1.bf16.xpose.msra.mxu0 0
        %605 = vmatprep.subr.bf16.mxu0 0
        %606 = vmatpush1.bf16.xpose.msra.mxu0 0
        %607 = vmatprep.subr.bf16.mxu0 0
        %608 = vmatpush1.bf16.xpose.msra.mxu0 0
        %609 = vmatprep.subr.bf16.mxu0 0
        %610 = vmatpush1.bf16.xpose.msra.mxu0 0
        %611 = vmatprep.subr.bf16.mxu0 0
        %612 = vmatpush1.bf16.xpose.msra.mxu0 0
        %613 = vmatprep.subr.bf16.mxu0 0
        %614 = vmatpush1.bf16.xpose.msra.mxu0 0
        %615 = vmatprep.subr.bf16.mxu0 0
        %616 = vmatpush1.bf16.xpose.msra.mxu0 0
        %617 = vmatprep.subr.bf16.mxu0 0
        %618 = vmatpush1.bf16.xpose.msra.mxu0 0
        %619 = vmatprep.subr.bf16.mxu0 0
        %620 = vmatpush1.bf16.xpose.msra.mxu0 0
        %621 = vmatprep.subr.bf16.mxu0 0
        %622 = vmatpush1.bf16.xpose.msra.mxu0 0
        %623 = vmatprep.subr.bf16.mxu0 0
        %624 = vmatpush1.bf16.xpose.msra.mxu0 0
        %625 = vmatprep.subr.bf16.mxu0 0
        %626 = vmatpush1.bf16.xpose.msra.mxu0 0
        %627 = vmatprep.subr.bf16.mxu0 0
        %628 = vmatpush1.bf16.xpose.msra.mxu0 0
        %629 = vmatprep.mubr.bf16.mxu0 0
        %630 = vmatmul.mubr.bf16.gmra.mrb[0].mxu0 %v592
        %v631 = vpop.f32.mrb[0].mxu0
        %v632 = vadd.f32 %v484, %v631
        %v633 = vpop.f32.mrb[0].mxu0
        %v634 = vpop.f32.mrb[0].mxu0
        %v635 = vpop.f32.mrb[0].mxu0
        %636 = vdwg.mxu0
        %v637 = vsel %vm590, %v632, -inf
        %638 = vmax.xlane.f32.xlu0 %v637
        %v639 = vpop.xlane.xlu0 %638
        %v640 = vsub.f32 %v632, %v639
        %v641 = vmul.f32 %v640, 1.442695
        %v642 = vpow.pop %v641
        %v643 = vsel %vm590, %v642, 0.0
        %644 = vadd.xlane.f32.xlu0 %v643
        %v645 = vpop.xlane.xlu0 %644
        %v646 = vrcp.pop %v645
        %v647 = vmul.f32 %v642, %v646
        %v648 = vpack.c.bf16 %v647, %v647
        %649 = vrot.lane.b32.xlu0 %v586, 112
        %v650 = vpop.permute.xlu0 %649
        %v652 = vsel %vm590, %v648, 0
        %vm654 = vcmask 1043456
        %v656 = vsel %vm654, %v650, 0
        %658 = vmatprep.subr.bf16.mxu0 0
        %659 = vmatpush1.bf16.msra.mxu0 %v656
        %660 = vmatprep.subr.bf16.mxu0 0
        %661 = vmatpush1.bf16.msra.mxu0 0
        %662 = vmatprep.subr.bf16.mxu0 0
        %663 = vmatpush1.bf16.msra.mxu0 0
        %664 = vmatprep.subr.bf16.mxu0 0
        %665 = vmatpush1.bf16.msra.mxu0 0
        %666 = vmatprep.subr.bf16.mxu0 0
        %667 = vmatpush1.bf16.msra.mxu0 0
        %668 = vmatprep.subr.bf16.mxu0 0
        %669 = vmatpush1.bf16.msra.mxu0 0
        %670 = vmatprep.subr.bf16.mxu0 0
        %671 = vmatpush1.bf16.msra.mxu0 0
        %672 = vmatprep.subr.bf16.mxu0 0
        %673 = vmatpush1.bf16.msra.mxu0 0
        %674 = vmatprep.subr.bf16.mxu0 0
        %675 = vmatpush1.bf16.msra.mxu0 0
        %676 = vmatprep.subr.bf16.mxu0 0
        %677 = vmatpush1.bf16.msra.mxu0 0
        %678 = vmatprep.subr.bf16.mxu0 0
        %679 = vmatpush1.bf16.msra.mxu0 0
        %680 = vmatprep.subr.bf16.mxu0 0
        %681 = vmatpush1.bf16.msra.mxu0 0
        %682 = vmatprep.subr.bf16.mxu0 0
        %683 = vmatpush1.bf16.msra.mxu0 0
        %684 = vmatprep.subr.bf16.mxu0 0
        %685 = vmatpush1.bf16.msra.mxu0 0
        %686 = vmatprep.subr.bf16.mxu0 0
        %687 = vmatpush1.bf16.msra.mxu0 0
        %688 = vmatprep.subr.bf16.mxu0 0
        %689 = vmatpush1.bf16.msra.mxu0 0
        %690 = vmatprep.mubr.bf16.mxu0 0
        %691 = vmatmul.mubr.bf16.gmra.mrb[0].mxu0 %v652
        %v692 = vpop.f32.mrb[0].mxu0
        %v693 = vadd.f32 0.0, %v692
        %v694 = vpop.f32.mrb[0].mxu0
        %v695 = vpop.f32.mrb[0].mxu0
        %v696 = vpop.f32.mrb[0].mxu0
        %697 = vdwg.mxu0
        %v698 = vpack.c.bf16 %v693, %v693
        %vm699 = vcmask 60416
        %700 = vst.msk [vmem:[#allocation2] sm:$0xf] %vm699, %v698
        %701 = vrot.lane.b32.xlu0 %v586, 104
        %v702 = vpop.permute.xlu0 %701
        %703 = vrot.lane.b32.xlu0 %v586, 96
        %v704 = vpop.permute.xlu0 %703
        %v706 = vsel %vm590, %v702, 0
        %v709 = vsel %vm590, %v704, 0
        %711 = vmatprep.subr.bf16.mxu0 0
        %712 = vmatpush1.bf16.xpose.msra.mxu0 %v709
        %713 = vmatprep.subr.bf16.mxu0 0
        %714 = vmatpush1.bf16.xpose.msra.mxu0 0
        %715 = vmatprep.subr.bf16.mxu0 0
        %716 = vmatpush1.bf16.xpose.msra.mxu0 0
        %717 = vmatprep.subr.bf16.mxu0 0
        %718 = vmatpush1.bf16.xpose.msra.mxu0 0
        %719 = vmatprep.subr.bf16.mxu0 0
        %720 = vmatpush1.bf16.xpose.msra.mxu0 0
        %721 = vmatprep.subr.bf16.mxu0 0
        %722 = vmatpush1.bf16.xpose.msra.mxu0 0
        %723 = vmatprep.subr.bf16.mxu0 0
        %724 = vmatpush1.bf16.xpose.msra.mxu0 0
        %725 = vmatprep.subr.bf16.mxu0 0
        %726 = vmatpush1.bf16.xpose.msra.mxu0 0
        %727 = vmatprep.subr.bf16.mxu0 0
        %728 = vmatpush1.bf16.xpose.msra.mxu0 0
        %729 = vmatprep.subr.bf16.mxu0 0
        %730 = vmatpush1.bf16.xpose.msra.mxu0 0
        %731 = vmatprep.subr.bf16.mxu0 0
        %732 = vmatpush1.bf16.xpose.msra.mxu0 0
        %733 = vmatprep.subr.bf16.mxu0 0
        %734 = vmatpush1.bf16.xpose.msra.mxu0 0
        %735 = vmatprep.subr.bf16.mxu0 0
        %736 = vmatpush1.bf16.xpose.msra.mxu0 0
        %737 = vmatprep.subr.bf16.mxu0 0
        %738 = vmatpush1.bf16.xpose.msra.mxu0 0
        %739 = vmatprep.subr.bf16.mxu0 0
        %740 = vmatpush1.bf16.xpose.msra.mxu0 0
        %741 = vmatprep.subr.bf16.mxu0 0
        %742 = vmatpush1.bf16.xpose.msra.mxu0 0
        %743 = vmatprep.mubr.bf16.mxu0 0
        %744 = vmatmul.mubr.bf16.gmra.mrb[0].mxu0 %v706
        %v745 = vpop.f32.mrb[0].mxu0
        %v746 = vadd.f32 %v484, %v745
        %v747 = vpop.f32.mrb[0].mxu0
        %v748 = vpop.f32.mrb[0].mxu0
        %v749 = vpop.f32.mrb[0].mxu0
        %750 = vdwg.mxu0
        %v751 = vsel %vm590, %v746, -inf
        %752 = vmax.xlane.f32.xlu0 %v751
        %v753 = vpop.xlane.xlu0 %752
        %v754 = vsub.f32 %v746, %v753
        %v755 = vmul.f32 %v754, 1.442695
        %v756 = vpow.pop %v755
        %v757 = vsel %vm590, %v756, 0.0
        %758 = vadd.xlane.f32.xlu0 %v757
        %v759 = vpop.xlane.xlu0 %758
        %v760 = vrcp.pop %v759
        %v761 = vmul.f32 %v756, %v760
        %v762 = vpack.c.bf16 %v761, %v761
        %763 = vrot.lane.b32.xlu0 %v586, 88
        %v764 = vpop.permute.xlu0 %763
        %v766 = vsel %vm590, %v762, 0
        %v769 = vsel %vm654, %v764, 0
        %771 = vmatprep.subr.bf16.mxu0 0
        %772 = vmatpush1.bf16.msra.mxu0 %v769
        %773 = vmatprep.subr.bf16.mxu0 0
        %774 = vmatpush1.bf16.msra.mxu0 0
        %775 = vmatprep.subr.bf16.mxu0 0
        %776 = vmatpush1.bf16.msra.mxu0 0
        %777 = vmatprep.subr.bf16.mxu0 0
        %778 = vmatpush1.bf16.msra.mxu0 0
        %779 = vmatprep.subr.bf16.mxu0 0
        %780 = vmatpush1.bf16.msra.mxu0 0
        %781 = vmatprep.subr.bf16.mxu0 0
        %782 = vmatpush1.bf16.msra.mxu0 0
        %783 = vmatprep.subr.bf16.mxu0 0
        %784 = vmatpush1.bf16.msra.mxu0 0
        %785 = vmatprep.subr.bf16.mxu0 0
        %786 = vmatpush1.bf16.msra.mxu0 0
        %787 = vmatprep.subr.bf16.mxu0 0
        %788 = vmatpush1.bf16.msra.mxu0 0
        %789 = vmatprep.subr.bf16.mxu0 0
        %790 = vmatpush1.bf16.msra.mxu0 0
        %791 = vmatprep.subr.bf16.mxu0 0
        %792 = vmatpush1.bf16.msra.mxu0 0
        %793 = vmatprep.subr.bf16.mxu0 0
        %794 = vmatpush1.bf16.msra.mxu0 0
        %795 = vmatprep.subr.bf16.mxu0 0
        %796 = vmatpush1.bf16.msra.mxu0 0
        %797 = vmatprep.subr.bf16.mxu0 0
        %798 = vmatpush1.bf16.msra.mxu0 0
        %799 = vmatprep.subr.bf16.mxu0 0
        %800 = vmatpush1.bf16.msra.mxu0 0
        %801 = vmatprep.subr.bf16.mxu0 0
        %802 = vmatpush1.bf16.msra.mxu0 0
        %803 = vmatprep.mubr.bf16.mxu0 0
        %804 = vmatmul.mubr.bf16.gmra.mrb[0].mxu0 %v766
        %v805 = vpop.f32.mrb[0].mxu0
        %v806 = vadd.f32 0.0, %v805
        %v807 = vpop.f32.mrb[0].mxu0
        %v808 = vpop.f32.mrb[0].mxu0
        %v809 = vpop.f32.mrb[0].mxu0
        %810 = vdwg.mxu0
        %v811 = vpack.c.bf16 %v806, %v806
        %v813 = vunpack.c.l.b16 %v811
        %v814 = vpack.c.b16 %v813, %v813
        %815 = vrot.lane.b32.xlu0 %v814, 8
        %v816 = vpop.permute.xlu0 %815
        %vm818 = vcmask 126016
        %819 = vst.msk [vmem:[#allocation2] sm:$0xf] %vm818, %v816
        %820 = vrot.lane.b32.xlu0 %v586, 80
        %v821 = vpop.permute.xlu0 %820
        %822 = vrot.lane.b32.xlu0 %v586, 72
        %v823 = vpop.permute.xlu0 %822
        %v825 = vsel %vm590, %v821, 0
        %v828 = vsel %vm590, %v823, 0
        %830 = vmatprep.subr.bf16.mxu0 0
        %831 = vmatpush1.bf16.xpose.msra.mxu0 %v828
        %832 = vmatprep.subr.bf16.mxu0 0
        %833 = vmatpush1.bf16.xpose.msra.mxu0 0
        %834 = vmatprep.subr.bf16.mxu0 0
        %835 = vmatpush1.bf16.xpose.msra.mxu0 0
        %836 = vmatprep.subr.bf16.mxu0 0
        %837 = vmatpush1.bf16.xpose.msra.mxu0 0
        %838 = vmatprep.subr.bf16.mxu0 0
        %839 = vmatpush1.bf16.xpose.msra.mxu0 0
        %840 = vmatprep.subr.bf16.mxu0 0
        %841 = vmatpush1.bf16.xpose.msra.mxu0 0
        %842 = vmatprep.subr.bf16.mxu0 0
        %843 = vmatpush1.bf16.xpose.msra.mxu0 0
        %844 = vmatprep.subr.bf16.mxu0 0
        %845 = vmatpush1.bf16.xpose.msra.mxu0 0
        %846 = vmatprep.subr.bf16.mxu0 0
        %847 = vmatpush1.bf16.xpose.msra.mxu0 0
        %848 = vmatprep.subr.bf16.mxu0 0
        %849 = vmatpush1.bf16.xpose.msra.mxu0 0
        %850 = vmatprep.subr.bf16.mxu0 0
        %851 = vmatpush1.bf16.xpose.msra.mxu0 0
        %852 = vmatprep.subr.bf16.mxu0 0
        %853 = vmatpush1.bf16.xpose.msra.mxu0 0
        %854 = vmatprep.subr.bf16.mxu0 0
        %855 = vmatpush1.bf16.xpose.msra.mxu0 0
        %856 = vmatprep.subr.bf16.mxu0 0
        %857 = vmatpush1.bf16.xpose.msra.mxu0 0
        %858 = vmatprep.subr.bf16.mxu0 0
        %859 = vmatpush1.bf16.xpose.msra.mxu0 0
        %860 = vmatprep.subr.bf16.mxu0 0
        %861 = vmatpush1.bf16.xpose.msra.mxu0 0
        %862 = vmatprep.mubr.bf16.mxu0 0
        %863 = vmatmul.mubr.bf16.gmra.mrb[0].mxu0 %v825
        %v864 = vpop.f32.mrb[0].mxu0
        %v865 = vadd.f32 %v484, %v864
        %v866 = vpop.f32.mrb[0].mxu0
        %v867 = vpop.f32.mrb[0].mxu0
        %v868 = vpop.f32.mrb[0].mxu0
        %869 = vdwg.mxu0
        %v870 = vsel %vm590, %v865, -inf
        %871 = vmax.xlane.f32.xlu0 %v870
        %v872 = vpop.xlane.xlu0 %871
        %v873 = vsub.f32 %v865, %v872
        %v874 = vmul.f32 %v873, 1.442695
        %v875 = vpow.pop %v874
        %v876 = vsel %vm590, %v875, 0.0
        %877 = vadd.xlane.f32.xlu0 %v876
        %v878 = vpop.xlane.xlu0 %877
        %v879 = vrcp.pop %v878
        %v880 = vmul.f32 %v875, %v879
        %v881 = vpack.c.bf16 %v880, %v880
        %882 = vrot.lane.b32.xlu0 %v586, 64
        %v883 = vpop.permute.xlu0 %882
        %v885 = vsel %vm590, %v881, 0
        %v888 = vsel %vm654, %v883, 0
        %890 = vmatprep.subr.bf16.mxu0 0
        %891 = vmatpush1.bf16.msra.mxu0 %v888
        %892 = vmatprep.subr.bf16.mxu0 0
        %893 = vmatpush1.bf16.msra.mxu0 0
        %894 = vmatprep.subr.bf16.mxu0 0
        %895 = vmatpush1.bf16.msra.mxu0 0
        %896 = vmatprep.subr.bf16.mxu0 0
        %897 = vmatpush1.bf16.msra.mxu0 0
        %898 = vmatprep.subr.bf16.mxu0 0
        %899 = vmatpush1.bf16.msra.mxu0 0
        %900 = vmatprep.subr.bf16.mxu0 0
        %901 = vmatpush1.bf16.msra.mxu0 0
        %902 = vmatprep.subr.bf16.mxu0 0
        %903 = vmatpush1.bf16.msra.mxu0 0
        %904 = vmatprep.subr.bf16.mxu0 0
        %905 = vmatpush1.bf16.msra.mxu0 0
        %906 = vmatprep.subr.bf16.mxu0 0
        %907 = vmatpush1.bf16.msra.mxu0 0
        %908 = vmatprep.subr.bf16.mxu0 0
        %909 = vmatpush1.bf16.msra.mxu0 0
        %910 = vmatprep.subr.bf16.mxu0 0
        %911 = vmatpush1.bf16.msra.mxu0 0
        %912 = vmatprep.subr.bf16.mxu0 0
        %913 = vmatpush1.bf16.msra.mxu0 0
        %914 = vmatprep.subr.bf16.mxu0 0
        %915 = vmatpush1.bf16.msra.mxu0 0
        %916 = vmatprep.subr.bf16.mxu0 0
        %917 = vmatpush1.bf16.msra.mxu0 0
        %918 = vmatprep.subr.bf16.mxu0 0
        %919 = vmatpush1.bf16.msra.mxu0 0
        %920 = vmatprep.subr.bf16.mxu0 0
        %921 = vmatpush1.bf16.msra.mxu0 0
        %922 = vmatprep.mubr.bf16.mxu0 0
        %923 = vmatmul.mubr.bf16.gmra.mrb[0].mxu0 %v885
        %v924 = vpop.f32.mrb[0].mxu0
        %v925 = vadd.f32 0.0, %v924
        %v926 = vpop.f32.mrb[0].mxu0
        %v927 = vpop.f32.mrb[0].mxu0
        %v928 = vpop.f32.mrb[0].mxu0
        %929 = vdwg.mxu0
        %v930 = vpack.c.bf16 %v925, %v925
        %v932 = vunpack.c.l.b16 %v930
        %v933 = vpack.c.b16 %v932, %v932
        %934 = vrot.lane.b32.xlu0 %v933, 16
        %v935 = vpop.permute.xlu0 %934
        %vm937 = vcmask 191616
        %938 = vst.msk [vmem:[#allocation2] sm:$0xf] %vm937, %v935
        %939 = vrot.lane.b32.xlu0 %v586, 56
        %v940 = vpop.permute.xlu0 %939
        %941 = vrot.lane.b32.xlu0 %v586, 48
        %v942 = vpop.permute.xlu0 %941
        %v944 = vsel %vm590, %v940, 0
        %v947 = vsel %vm590, %v942, 0
        %949 = vmatprep.subr.bf16.mxu0 0
        %950 = vmatpush1.bf16.xpose.msra.mxu0 %v947
        %951 = vmatprep.subr.bf16.mxu0 0
        %952 = vmatpush1.bf16.xpose.msra.mxu0 0
        %953 = vmatprep.subr.bf16.mxu0 0
        %954 = vmatpush1.bf16.xpose.msra.mxu0 0
        %955 = vmatprep.subr.bf16.mxu0 0
        %956 = vmatpush1.bf16.xpose.msra.mxu0 0
        %957 = vmatprep.subr.bf16.mxu0 0
        %958 = vmatpush1.bf16.xpose.msra.mxu0 0
        %959 = vmatprep.subr.bf16.mxu0 0
        %960 = vmatpush1.bf16.xpose.msra.mxu0 0
        %961 = vmatprep.subr.bf16.mxu0 0
        %962 = vmatpush1.bf16.xpose.msra.mxu0 0
        %963 = vmatprep.subr.bf16.mxu0 0
        %964 = vmatpush1.bf16.xpose.msra.mxu0 0
        %965 = vmatprep.subr.bf16.mxu0 0
        %966 = vmatpush1.bf16.xpose.msra.mxu0 0
        %967 = vmatprep.subr.bf16.mxu0 0
        %968 = vmatpush1.bf16.xpose.msra.mxu0 0
        %969 = vmatprep.subr.bf16.mxu0 0
        %970 = vmatpush1.bf16.xpose.msra.mxu0 0
        %971 = vmatprep.subr.bf16.mxu0 0
        %972 = vmatpush1.bf16.xpose.msra.mxu0 0
        %973 = vmatprep.subr.bf16.mxu0 0
        %974 = vmatpush1.bf16.xpose.msra.mxu0 0
        %975 = vmatprep.subr.bf16.mxu0 0
        %976 = vmatpush1.bf16.xpose.msra.mxu0 0
        %977 = vmatprep.subr.bf16.mxu0 0
        %978 = vmatpush1.bf16.xpose.msra.mxu0 0
        %979 = vmatprep.subr.bf16.mxu0 0
        %980 = vmatpush1.bf16.xpose.msra.mxu0 0
        %981 = vmatprep.mubr.bf16.mxu0 0
        %982 = vmatmul.mubr.bf16.gmra.mrb[0].mxu0 %v944
        %v983 = vpop.f32.mrb[0].mxu0
        %v984 = vadd.f32 %v484, %v983
        %v985 = vpop.f32.mrb[0].mxu0
        %v986 = vpop.f32.mrb[0].mxu0
        %v987 = vpop.f32.mrb[0].mxu0
        %988 = vdwg.mxu0
        %v989 = vsel %vm590, %v984, -inf
        %990 = vmax.xlane.f32.xlu0 %v989
        %v991 = vpop.xlane.xlu0 %990
        %v992 = vsub.f32 %v984, %v991
        %v993 = vmul.f32 %v992, 1.442695
        %v994 = vpow.pop %v993
        %v995 = vsel %vm590, %v994, 0.0
        %996 = vadd.xlane.f32.xlu0 %v995
        %v997 = vpop.xlane.xlu0 %996
        %v998 = vrcp.pop %v997
        %v999 = vmul.f32 %v994, %v998
        %v1000 = vpack.c.bf16 %v999, %v999
        %1001 = vrot.lane.b32.xlu0 %v586, 40
        %v1002 = vpop.permute.xlu0 %1001
        %v1004 = vsel %vm590, %v1000, 0
        %v1007 = vsel %vm654, %v1002, 0
        %1009 = vmatprep.subr.bf16.mxu0 0
        %1010 = vmatpush1.bf16.msra.mxu0 %v1007
        %1011 = vmatprep.subr.bf16.mxu0 0
        %1012 = vmatpush1.bf16.msra.mxu0 0
        %1013 = vmatprep.subr.bf16.mxu0 0
        %1014 = vmatpush1.bf16.msra.mxu0 0
        %1015 = vmatprep.subr.bf16.mxu0 0
        %1016 = vmatpush1.bf16.msra.mxu0 0
        %1017 = vmatprep.subr.bf16.mxu0 0
        %1018 = vmatpush1.bf16.msra.mxu0 0
        %1019 = vmatprep.subr.bf16.mxu0 0
        %1020 = vmatpush1.bf16.msra.mxu0 0
        %1021 = vmatprep.subr.bf16.mxu0 0
        %1022 = vmatpush1.bf16.msra.mxu0 0
        %1023 = vmatprep.subr.bf16.mxu0 0
        %1024 = vmatpush1.bf16.msra.mxu0 0
        %1025 = vmatprep.subr.bf16.mxu0 0
        %1026 = vmatpush1.bf16.msra.mxu0 0
        %1027 = vmatprep.subr.bf16.mxu0 0
        %1028 = vmatpush1.bf16.msra.mxu0 0
        %1029 = vmatprep.subr.bf16.mxu0 0
        %1030 = vmatpush1.bf16.msra.mxu0 0
        %1031 = vmatprep.subr.bf16.mxu0 0
        %1032 = vmatpush1.bf16.msra.mxu0 0
        %1033 = vmatprep.subr.bf16.mxu0 0
        %1034 = vmatpush1.bf16.msra.mxu0 0
        %1035 = vmatprep.subr.bf16.mxu0 0
        %1036 = vmatpush1.bf16.msra.mxu0 0
        %1037 = vmatprep.subr.bf16.mxu0 0
        %1038 = vmatpush1.bf16.msra.mxu0 0
        %1039 = vmatprep.subr.bf16.mxu0 0
        %1040 = vmatpush1.bf16.msra.mxu0 0
        %1041 = vmatprep.mubr.bf16.mxu0 0
        %1042 = vmatmul.mubr.bf16.gmra.mrb[0].mxu0 %v1004
        %v1043 = vpop.f32.mrb[0].mxu0
        %v1044 = vadd.f32 0.0, %v1043
        %v1045 = vpop.f32.mrb[0].mxu0
        %v1046 = vpop.f32.mrb[0].mxu0
        %v1047 = vpop.f32.mrb[0].mxu0
        %1048 = vdwg.mxu0
        %v1049 = vpack.c.bf16 %v1044, %v1044
        %v1051 = vunpack.c.l.b16 %v1049
        %v1052 = vpack.c.b16 %v1051, %v1051
        %1053 = vrot.lane.b32.xlu0 %v1052, 24
        %v1054 = vpop.permute.xlu0 %1053
        %vm1056 = vcmask 257216
        %1057 = vst.msk [vmem:[#allocation2] sm:$0xf] %vm1056, %v1054
        %v1058 = vld [vmem:[#allocation2] sm:$0xf]
        %v1059 = vld [vmem:[%s6] sm:$0xf]
        %v1060 = vld [vmem:[%s6 + $0x4] sm:$0xf]
        %v1061 = vld [vmem:[%s6 + $0x8] sm:$0xf]
        %v1062 = vld [vmem:[%s6 + $0xc] sm:$0xf]
        %v1063 = vld [vmem:[%s7] sm:$0x1]
        %v1065 = vlaneseq
        %v1066 = vshrl.u32 %v1065, 7
        %v1067 = vsub.s32 0, %v1066
        %v1068 = vrot.slane %v1063, %v1067
        %v1074 = vunpack.c.l.b16 %v1059
        %v1075 = vunpack.c.l.b16 %v1060
        %v1076 = vunpack.c.l.b16 %v1061
        %v1077 = vunpack.c.l.b16 %v1062
        %v1078 = vpack.c.b16 %v1075, %v1074
        %v1079 = vpack.c.b16 %v1077, %v1076
        %v1083 = vsel %vm485, %v1058, 0
        %1085 = vmatprep.subr.bf16.mxu0 0
        %1086 = vmatpush1.bf16.msra.mxu0 %v1078
        %1087 = vmatprep.subr.bf16.mxu0 0
        %1088 = vmatpush1.bf16.msra.mxu0 %v1079
        %1089 = vmatprep.subr.bf16.mxu0 0
        %1090 = vmatpush1.bf16.msra.mxu0 0
        %1091 = vmatprep.subr.bf16.mxu0 0
        %1092 = vmatpush1.bf16.msra.mxu0 0
        %1093 = vmatprep.subr.bf16.mxu0 0
        %1094 = vmatpush1.bf16.msra.mxu0 0
        %1095 = vmatprep.subr.bf16.mxu0 0
        %1096 = vmatpush1.bf16.msra.mxu0 0
        %1097 = vmatprep.subr.bf16.mxu0 0
        %1098 = vmatpush1.bf16.msra.mxu0 0
        %1099 = vmatprep.subr.bf16.mxu0 0
        %1100 = vmatpush1.bf16.msra.mxu0 0
        %1101 = vmatprep.subr.bf16.mxu0 0
        %1102 = vmatpush1.bf16.msra.mxu0 0
        %1103 = vmatprep.subr.bf16.mxu0 0
        %1104 = vmatpush1.bf16.msra.mxu0 0
        %1105 = vmatprep.subr.bf16.mxu0 0
        %1106 = vmatpush1.bf16.msra.mxu0 0
        %1107 = vmatprep.subr.bf16.mxu0 0
        %1108 = vmatpush1.bf16.msra.mxu0 0
        %1109 = vmatprep.subr.bf16.mxu0 0
        %1110 = vmatpush1.bf16.msra.mxu0 0
        %1111 = vmatprep.subr.bf16.mxu0 0
        %1112 = vmatpush1.bf16.msra.mxu0 0
        %1113 = vmatprep.subr.bf16.mxu0 0
        %1114 = vmatpush1.bf16.msra.mxu0 0
        %1115 = vmatprep.subr.bf16.mxu0 0
        %1116 = vmatpush1.bf16.msra.mxu0 0
        %1117 = vmatprep.mubr.bf16.mxu0 0
        %1118 = vmatmul.mubr.bf16.gmra.mrb[0].mxu0 %v1083
        %v1119 = vpop.f32.mrb[0].mxu0
        %v1120 = vadd.f32 %v1068, %v1119
        %v1121 = vpop.f32.mrb[0].mxu0
        %v1122 = vpop.f32.mrb[0].mxu0
        %v1123 = vpop.f32.mrb[0].mxu0
        %1124 = vdwg.mxu0
        %v1125 = vadd.f32 %v483, %v1120
        %v1126 = vsel %vm485, %v1125, 0.0
        %1127 = vadd.xlane.f32.xlu0 %v1126
        %v1128 = vpop.xlane.xlu0 %1127
        %v1129 = vmul.f32 %v1128, %v489
        %v1130 = vmul.f32 %v1125, %v1125
        %v1131 = vsel %vm485, %v1130, 0.0
        %1132 = vadd.xlane.f32.xlu0 %v1131
        %v1133 = vpop.xlane.xlu0 %1132
        %v1134 = vmul.f32 %v1133, %v489
        %v1135 = vmul.f32 %v1129, %v1129
        %v1136 = vsub.f32 %v1134, %v1135
        %v1137 = vmax.f32 %v1136, 0.0
        %v1138 = vsub.f32 %v1125, %v1129
        %v1139 = vadd.f32 %v1137, 1e-05
        %v1140 = vrsqrt.pop %v1139
        %v1141 = vmul.f32 %v1138, %v1140
        %v1142 = vld [vmem:[%s8] sm:$0x1]
        %v1144 = vlaneseq
        %v1145 = vshrl.u32 %v1144, 7
        %v1146 = vsub.s32 0, %v1145
        %v1147 = vrot.slane %v1142, %v1146
        %v1149 = vmul.f32 %v1141, %v1147
        %v1150 = vld [vmem:[%s9] sm:$0x1]
        %v1152 = vlaneseq
        %v1153 = vshrl.u32 %v1152, 7
        %v1154 = vsub.s32 0, %v1153
        %v1155 = vrot.slane %v1150, %v1154
        %v1157 = vadd.f32 %v1149, %v1155
        %v1158 = vpack.c.bf16 %v1157, %v1157
        %v1159 = vld [vmem:[%s10] sm:$0xf]
        %v1160 = vld [vmem:[%s10 + $0x4] sm:$0xf]
        %v1161 = vld [vmem:[%s10 + $0x8] sm:$0xf]
        %v1162 = vld [vmem:[%s10 + $0xc] sm:$0xf]
        %v1163 = vld [vmem:[%s11] sm:$0x1]
        %v1165 = vlaneseq
        %v1166 = vshrl.u32 %v1165, 7
        %v1167 = vsub.s32 0, %v1166
        %v1168 = vrot.slane %v1163, %v1167
        %v1174 = vunpack.c.l.b16 %v1159
        %v1175 = vunpack.c.l.b16 %v1160
        %v1176 = vunpack.c.l.b16 %v1161
        %v1177 = vunpack.c.l.b16 %v1162
        %v1178 = vpack.c.b16 %v1175, %v1174
        %v1179 = vpack.c.b16 %v1177, %v1176
        %v1183 = vsel %vm485, %v1158, 0
        %1185 = vmatprep.subr.bf16.mxu0 0
        %1186 = vmatpush1.bf16.msra.mxu0 %v1178
        %1187 = vmatprep.subr.bf16.mxu0 0
        %1188 = vmatpush1.bf16.msra.mxu0 %v1179
        %1189 = vmatprep.subr.bf16.mxu0 0
        %1190 = vmatpush1.bf16.msra.mxu0 0
        %1191 = vmatprep.subr.bf16.mxu0 0
        %1192 = vmatpush1.bf16.msra.mxu0 0
        %1193 = vmatprep.subr.bf16.mxu0 0
        %1194 = vmatpush1.bf16.msra.mxu0 0
        %1195 = vmatprep.subr.bf16.mxu0 0
        %1196 = vmatpush1.bf16.msra.mxu0 0
        %1197 = vmatprep.subr.bf16.mxu0 0
        %1198 = vmatpush1.bf16.msra.mxu0 0
        %1199 = vmatprep.subr.bf16.mxu0 0
        %1200 = vmatpush1.bf16.msra.mxu0 0
        %1201 = vmatprep.subr.bf16.mxu0 0
        %1202 = vmatpush1.bf16.msra.mxu0 0
        %1203 = vmatprep.subr.bf16.mxu0 0
        %1204 = vmatpush1.bf16.msra.mxu0 0
        %1205 = vmatprep.subr.bf16.mxu0 0
        %1206 = vmatpush1.bf16.msra.mxu0 0
        %1207 = vmatprep.subr.bf16.mxu0 0
        %1208 = vmatpush1.bf16.msra.mxu0 0
        %1209 = vmatprep.subr.bf16.mxu0 0
        %1210 = vmatpush1.bf16.msra.mxu0 0
        %1211 = vmatprep.subr.bf16.mxu0 0
        %1212 = vmatpush1.bf16.msra.mxu0 0
        %1213 = vmatprep.subr.bf16.mxu0 0
        %1214 = vmatpush1.bf16.msra.mxu0 0
        %1215 = vmatprep.subr.bf16.mxu0 0
        %1216 = vmatpush1.bf16.msra.mxu0 0
        %1217 = vmatprep.mubr.bf16.mxu0 0
        %1218 = vmatmul.mubr.bf16.gmra.mrb[0].mxu0 %v1183
        %v1219 = vpop.f32.mrb[0].mxu0
        %v1220 = vadd.f32 %v1168, %v1219
        %v1221 = vpop.f32.mrb[0].mxu0
        %v1222 = vpop.f32.mrb[0].mxu0
        %v1223 = vpop.f32.mrb[0].mxu0
        %1224 = vdwg.mxu0
        %v1225 = vpack.c.bf16 %v1220, %v1220
        %v1226 = vmul.bf16 %v1225, 1071267802
        %v1227 = vxor.u32 %v1226, 2147516416
        %v1229 = vmul.bf16 %v1227, 1069105081
        %v1230 = vpow.bf16.pop %v1229
        %v1231 = vadd.bf16 %v1230, 1065369472
        %v1232 = vrcp.bf16.pop %v1231
        %v1233 = vmul.bf16 1065369472, %v1232
        %v1234 = vmul.bf16 %v1225, %v1233
        %v1235 = vld [vmem:[%s12] sm:$0xf]
        %v1236 = vld [vmem:[%s12 + $0x4] sm:$0xf]
        %v1237 = vld [vmem:[%s12 + $0x8] sm:$0xf]
        %v1238 = vld [vmem:[%s12 + $0xc] sm:$0xf]
        %v1239 = vld [vmem:[%s12 + $0x10] sm:$0xf]
        %v1240 = vld [vmem:[%s12 + $0x14] sm:$0xf]
        %v1241 = vld [vmem:[%s12 + $0x18] sm:$0xf]
        %v1242 = vld [vmem:[%s12 + $0x1c] sm:$0xf]
        %v1243 = vld [vmem:[%s12 + $0x20] sm:$0xf]
        %v1244 = vld [vmem:[%s12 + $0x24] sm:$0xf]
        %v1245 = vld [vmem:[%s12 + $0x28] sm:$0xf]
        %v1246 = vld [vmem:[%s12 + $0x2c] sm:$0xf]
        %v1247 = vld [vmem:[%s12 + $0x30] sm:$0xf]
        %v1248 = vld [vmem:[%s12 + $0x34] sm:$0xf]
        %v1249 = vld [vmem:[%s12 + $0x38] sm:$0xf]
        %v1250 = vld [vmem:[%s12 + $0x3c] sm:$0xf]
        %v1251 = vld [vmem:[%s13] sm:$0x1]
        %v1253 = vlaneseq
        %v1254 = vshrl.u32 %v1253, 7
        %v1255 = vsub.s32 0, %v1254
        %v1256 = vrot.slane %v1251, %v1255
        %v1274 = vunpack.c.l.b16 %v1235
        %v1275 = vunpack.c.l.b16 %v1236
        %v1276 = vunpack.c.l.b16 %v1237
        %v1277 = vunpack.c.l.b16 %v1238
        %v1278 = vunpack.c.l.b16 %v1239
        %v1279 = vunpack.c.l.b16 %v1240
        %v1280 = vunpack.c.l.b16 %v1241
        %v1281 = vunpack.c.l.b16 %v1242
        %v1282 = vunpack.c.l.b16 %v1243
        %v1283 = vunpack.c.l.b16 %v1244
        %v1284 = vunpack.c.l.b16 %v1245
        %v1285 = vunpack.c.l.b16 %v1246
        %v1286 = vunpack.c.l.b16 %v1247
        %v1287 = vunpack.c.l.b16 %v1248
        %v1288 = vunpack.c.l.b16 %v1249
        %v1289 = vunpack.c.l.b16 %v1250
        %v1290 = vpack.c.b16 %v1275, %v1274
        %v1291 = vpack.c.b16 %v1277, %v1276
        %v1292 = vpack.c.b16 %v1279, %v1278
        %v1293 = vpack.c.b16 %v1281, %v1280
        %v1294 = vpack.c.b16 %v1283, %v1282
        %v1295 = vpack.c.b16 %v1285, %v1284
        %v1296 = vpack.c.b16 %v1287, %v1286
        %v1297 = vpack.c.b16 %v1289, %v1288
        %1306 = vmatprep.subr.bf16.mxu0 0
        %1307 = vmatpush1.bf16.msra.mxu0 %v1290
        %1308 = vmatprep.subr.bf16.mxu0 0
        %1309 = vmatpush1.bf16.msra.mxu0 %v1291
        %1310 = vmatprep.subr.bf16.mxu0 0
        %1311 = vmatpush1.bf16.msra.mxu0 %v1292
        %1312 = vmatprep.subr.bf16.mxu0 0
        %1313 = vmatpush1.bf16.msra.mxu0 %v1293
        %1314 = vmatprep.subr.bf16.mxu0 0
        %1315 = vmatpush1.bf16.msra.mxu0 %v1294
        %1316 = vmatprep.subr.bf16.mxu0 0
        %1317 = vmatpush1.bf16.msra.mxu0 %v1295
        %1318 = vmatprep.subr.bf16.mxu0 0
        %1319 = vmatpush1.bf16.msra.mxu0 %v1296
        %1320 = vmatprep.subr.bf16.mxu0 0
        %1321 = vmatpush1.bf16.msra.mxu0 %v1297
        %1322 = vmatprep.subr.bf16.mxu0 0
        %1323 = vmatpush1.bf16.msra.mxu0 0
        %1324 = vmatprep.subr.bf16.mxu0 0
        %1325 = vmatpush1.bf16.msra.mxu0 0
        %1326 = vmatprep.subr.bf16.mxu0 0
        %1327 = vmatpush1.bf16.msra.mxu0 0
        %1328 = vmatprep.subr.bf16.mxu0 0
        %1329 = vmatpush1.bf16.msra.mxu0 0
        %1330 = vmatprep.subr.bf16.mxu0 0
        %1331 = vmatpush1.bf16.msra.mxu0 0
        %1332 = vmatprep.subr.bf16.mxu0 0
        %1333 = vmatpush1.bf16.msra.mxu0 0
        %1334 = vmatprep.subr.bf16.mxu0 0
        %1335 = vmatpush1.bf16.msra.mxu0 0
        %1336 = vmatprep.subr.bf16.mxu0 0
        %1337 = vmatpush1.bf16.msra.mxu0 0
        %1338 = vmatprep.mubr.bf16.mxu0 0
        %1339 = vmatmul.mubr.bf16.gmra.mrb[0].mxu0 %v1234
        %v1340 = vpop.f32.mrb[0].mxu0
        %v1341 = vadd.f32 %v1256, %v1340
        %v1342 = vpop.f32.mrb[0].mxu0
        %v1343 = vpop.f32.mrb[0].mxu0
        %v1344 = vpop.f32.mrb[0].mxu0
        %1345 = vdwg.mxu0
        %v1346 = vadd.f32 %v1125, %v1341
        %1347 = vst.msk [vmem:[%s471] sm:$0xff] %vm485, %v1346
        %s1348 = sand.u32 %s340, 1
        %s1349 = scalar_lea.sflag [#allocation4], %s1348
        %s1350 = sand.u32 %s340, 1
        %s1351 = smul.addr %s1350, 8
        %s1352 = scalar_lea.vmem [#allocation3], %s1351
        // Predicated region
        $region77: #{tpu_custom_call.1} parent=75 // pred_check
          %p1353 = pneg %p350
        $region78: #{tpu_custom_call.1} parent=75 // pred_check_branch
          %1355 = sbr.rel (%p1353) target = $region80
        $region79: #{tpu_custom_call.1} parent=75 // pred_region
          %s1357 = ssub.s32 128, 128
          %1358 = vsyncadd %s1349, %s1357
          %s1359 = smul.addr %s28, 128
          %s1360 = scalar_lea.hbm %s14, %s1359
          %s1362 = sshll.u32 %s1352, 4
          %s1363 = int_to_ptr.vmem [resolvable:$true] %s1362
          %1365 = dma.vmem_to_hbm [thread:$0]  %s1363, 128, %s1360, %s1349
        $region80: #{tpu_custom_call.1} parent=75 // pred_fallthru
          _
      $region76: #{tpu_custom_call.1} parent=5 // pred_fallthru
        _
      %p1366 = scmp.le.s32.totalorder 2, %s23
      // Predicated region
      $region81: #{tpu_custom_call.1} parent=5 // pred_check
        %p1367 = pneg %p1366
      $region82: #{tpu_custom_call.1} parent=5 // pred_check_branch
        %1369 = sbr.rel (%p1367) target = $region84
      $region83: #{tpu_custom_call.1} parent=5 // pred_region
        %s1370 = ssub.s32 %s23, 2
        // Predicated region
        $region85: #{tpu_custom_call.1} parent=83 // pred_check
          %p1371 = pneg %p356
        $region86: #{tpu_custom_call.1} parent=83 // pred_check_branch
          %1373 = sbr.rel (%p1371) target = $region88
        $region87: #{tpu_custom_call.1} parent=83 // pred_region
          %s1374 = sand.u32 %s341, 1
          %s1375 = scalar_lea.sflag [#allocation4], %s1374
          %s1376 = sand.u32 %s341, 1
          %s1377 = smul.addr %s1376, 8
          %s1378 = scalar_lea.vmem [#allocation3], %s1377
          %1379 = dma.done %s1375, 128
        $region88: #{tpu_custom_call.1} parent=83 // pred_fallthru
          _
      $region84: #{tpu_custom_call.1} parent=5 // pred_fallthru
        _
    $region6: #{tpu_custom_call.1} parent=1 // loop_footer
      %s27 = sadd.s32 1, %s23
    $region7: #{tpu_custom_call.1} parent=1 // loop_footer_branch
      %22 = sbr.rel target = $region3
    $region8: #{tpu_custom_call.1} parent=1 // loop_exit
      _
    %1380 = vsyncpa [#allocation4], 1
    %s1381 = scalar_lea.sflag [#allocation4], 1
    %1382 = vsyncpa %s1381, 1

</llo_original>
